<compile_context>
chip_gen: v7x
topology: tpu7x:2x2x1
jax: 0.10.0
libtpu: 0.0.40
codegen_flags: <defaults>
</compile_context>

<pallas_src>
from functools import partial

import numpy as np

import jax
import jax.numpy as jnp
from jax.experimental import pallas as pl
from jax.experimental.pallas import tpu as pltpu


# --------------------------- fused Pallas kernel --------------------------- #

def _dqn_fused_kernel(x_ref,
                      w1_ref, b1_ref,
                      w2_ref, b2_ref,
                      w3_ref, b3_ref,
                      w4_ref, b4_ref,
                      w5_ref, b5_ref,
                      o_ref):
    """Whole DQN forward: 5 matmuls + bias + ReLU, all VMEM/vreg resident.

    x_ref:  [block_m, K0]   bf16, CHW-flattened (lane-padded) NCHW input block.
    w*_ref: bf16 GEMM weights (convs pre-lowered to Toeplitz matrices),
            every dim a multiple of 128.
    b*_ref: [1, out_features] f32 bias rows (implicit sublane broadcast).
    o_ref:  [block_m, 128] f32 lane-padded Q-values (sliced in the wrapper).
    """
    def layer(h, w_ref, b_ref, relu=True):
        y = jnp.dot(h.astype(jnp.bfloat16), w_ref[...],
                    preferred_element_type=jnp.float32) + b_ref[...]
        return jnp.maximum(y, 0.0) if relu else y

    h = layer(x_ref[...], w1_ref, b1_ref)
    h = layer(h, w2_ref, b2_ref)
    h = layer(h, w3_ref, b3_ref)
    h = layer(h, w4_ref, b4_ref)
    o_ref[...] = layer(h, w5_ref, b5_ref, relu=False).astype(o_ref.dtype)


@partial(jax.jit, static_argnames=("num_actions",))
def dqn_forward_fused(fused, x, *, num_actions):
    """x: [N, C, H, W] (PyTorch NCHW) -> [N, num_actions]."""
    n = x.shape[0]
    # Flatten in (C, H, W) order == torch x.view(N, -1).  Pure metadata
    # reshape; bf16 cast halves the input DMA (accumulation stays f32).
    x2d = x.reshape(n, -1).astype(jnp.bfloat16)
    k_pad = fused["w1"].shape[0]
    if x2d.shape[1] != k_pad:                       # no-op for the 4x8x8 case
        x2d = jnp.pad(x2d, ((0, 0), (0, k_pad - x2d.shape[1])))
    n_out_pad = fused["w5"].shape[1]                # lane-padded (128)

    # Grid over the batch axis: parallel => shards across v7x's 2 TensorCores,
    # pipelines x/out block DMA under compute.  block_m=512 keeps resident
    # bf16 weights (~1.3 MiB) + f32 activations well under v5e's 16 MiB
    # default scoped-VMEM limit.
    block_m = n if n <= 512 else 512
    grid = (pl.cdiv(n, block_m),)

    weight_args = (fused["w1"], fused["b1"],
                   fused["w2"], fused["b2"],
                   fused["w3"], fused["b3"],
                   fused["w4"], fused["b4"],
                   fused["w5"], fused["b5"])

    def resident(a):  # full-array block, constant index map -> fetched once
        return pl.BlockSpec(a.shape, lambda i: (0,) * a.ndim)

    in_specs = ([pl.BlockSpec((block_m, k_pad), lambda i: (i, 0))]
                + [resident(a) for a in weight_args])
    out_specs = pl.BlockSpec((block_m, n_out_pad), lambda i: (i, 0))

    flops = 2 * n * sum(int(w.shape[0]) * int(w.shape[1])
                        for w in weight_args[0::2])
    bytes_accessed = (x2d.size * x2d.dtype.itemsize
                      + sum(int(a.size) * a.dtype.itemsize for a in weight_args)
                      + n * n_out_pad * 4)

    out = pl.pallas_call(
        _dqn_fused_kernel,
        out_shape=jax.ShapeDtypeStruct((n, n_out_pad), jnp.float32),
        grid=grid,
        in_specs=in_specs,
        out_specs=out_specs,
        compiler_params=pltpu.CompilerParams(
            dimension_semantics=("parallel",),
            vmem_limit_bytes=32 * 1024 * 1024),
        cost_estimate=pl.CostEstimate(flops=flops, transcendentals=0,
                                      bytes_accessed=bytes_accessed),
    )(x2d, *weight_args)
    return out[:, :num_actions]


# --------------- one-time parameter preparation (host side) ---------------- #

def _round_up(x, m=128):
    return ((x + m - 1) // m) * m


def _pad2(a, rows, cols):
    return np.pad(a, ((0, rows - a.shape[0]), (0, cols - a.shape[1])))


def _conv_as_dense(w, b, hi, wi, stride, pad):
    """Lower a PyTorch conv (weight [Cout, Cin, kh, kw]) to a dense GEMM.

    Both input and output feature vectors are flattened in (C, H, W) order,
    matching torch's .view(N, -1) on NCHW tensors.  Returns
    (W_dense [Cin*Hi*Wi, Cout*Ho*Wo], b_dense [Cout*Ho*Wo], Ho, Wo).
    Runs once at init; the conv then costs a single MXU matmul at runtime.
    """
    w = np.asarray(w, np.float32)
    b = np.asarray(b, np.float32)
    cout, cin, kh, kw = w.shape
    ho_n = (hi + 2 * pad - kh) // stride + 1
    wo_n = (wi + 2 * pad - kw) // stride + 1
    dense = np.zeros((cin * hi * wi, cout * ho_n * wo_n), np.float32)
    cin_base = np.arange(cin) * (hi * wi)
    cout_base = np.arange(cout) * (ho_n * wo_n)
    for ho in range(ho_n):
        for wo in range(wo_n):
            cols = cout_base + ho * wo_n + wo
            for i in range(kh):
                for j in range(kw):
                    h_in = ho * stride + i - pad
                    w_in = wo * stride + j - pad
                    if 0 <= h_in < hi and 0 <= w_in < wi:
                        rows = cin_base + h_in * wi + w_in
                        dense[np.ix_(rows, cols)] += w[:, :, i, j].T  # [Cin, Cout]
    b_dense = np.repeat(b, ho_n * wo_n)
    return dense, b_dense, ho_n, wo_n


def prepare_fused_params(params, in_hw=(8, 8)):
    """Build the fused/dense, lane-padded, bf16 weights once (constants)."""
    h0, w0 = in_hw
    w1d, b1d, h1, w1o = _conv_as_dense(params["conv1_w"], params["conv1_b"], h0, w0, 2, 1)
    w2d, b2d, h2, w2o = _conv_as_dense(params["conv2_w"], params["conv2_b"], h1, w1o, 1, 0)
    w3d, b3d, _, _ = _conv_as_dense(params["conv3_w"], params["conv3_b"], h2, w2o, 1, 0)
    # PyTorch Linear weights are [out, in]; flatten order is already (C,H,W).
    w4d = np.asarray(params["fc4_w"], np.float32).T
    b4d = np.asarray(params["fc4_b"], np.float32)
    w5d = np.asarray(params["fc5_w"], np.float32).T
    b5d = np.asarray(params["fc5_b"], np.float32)
    assert w3d.shape[1] == w4d.shape[0], (w3d.shape, w4d.shape)

    # Guard: the dense Toeplitz lowering is only for toy frame sizes — at
    # real Atari 84x84 it is multiple GiB and blows past VMEM.
    dense_bytes_bf16 = 2 * (w1d.size + w2d.size + w3d.size)
    assert dense_bytes_bf16 < 8 * (1 << 20), (
        "dense conv lowering too large for VMEM; use im2col/blocked conv "
        "for frames larger than the toy 8x8 size")
    # TODO(synk): swap conv1-conv3 to in-kernel im2col GEMMs once this model
    # is run compute-bound at batch >= 256 (removes ~3x structural-zero MACs).

    # Lane-align every GEMM dim to a multiple of 128.  Zero padding is exact:
    # ReLU(0)=0 and zero rows/cols contribute nothing.
    k0 = _round_up(w1d.shape[0])          # input K (4*8*8 = 256, already aligned)
    n1 = _round_up(w1d.shape[1])          # 512
    n2 = _round_up(w2d.shape[1])          # 576 -> 640
    n3 = _round_up(w3d.shape[1])          # 256
    n4 = _round_up(w4d.shape[1])          # 128
    n5 = _round_up(w5d.shape[1])          # num_actions -> 128 (lane-dense out)

    w1p, b1p = _pad2(w1d, k0, n1), np.pad(b1d, (0, n1 - b1d.size))
    w2p, b2p = _pad2(w2d, n1, n2), np.pad(b2d, (0, n2 - b2d.size))
    w3p, b3p = _pad2(w3d, n2, n3), np.pad(b3d, (0, n3 - b3d.size))
    w4p, b4p = _pad2(w4d, n3, n4), np.pad(b4d, (0, n4 - b4d.size))
    w5p, b5p = _pad2(w5d, n4, n5), np.pad(b5d, (0, n5 - b5d.size))

    bf = lambda a: jnp.asarray(a, jnp.bfloat16)
    br = lambda a: jnp.asarray(a, jnp.float32).reshape(1, -1)
    return {
        "w1": bf(w1p), "b1": br(b1p),
        "w2": bf(w2p), "b2": br(b2p),
        "w3": bf(w3p), "b3": br(b3p),
        "w4": bf(w4p), "b4": br(b4p),
        "w5": bf(w5p), "b5": br(b5p),
    }


# ------------------------------ init & reference --------------------------- #

def init_dqn_params(key, num_actions, in_channels=4):
    ks = jax.random.split(key, 10)

    def u(k, shape, fan_in):
        bound = 1.0 / jnp.sqrt(fan_in)
        return jax.random.uniform(k, shape, jnp.float32, -bound, bound)

    return {
        "conv1_w": u(ks[0], (32, in_channels, 3, 3), in_channels * 9),
        "conv1_b": u(ks[1], (32,), in_channels * 9),
        "conv2_w": u(ks[2], (64, 32, 2, 2), 32 * 4),
        "conv2_b": u(ks[3], (64,), 32 * 4),
        "conv3_w": u(ks[4], (64, 64, 2, 2), 64 * 4),
        "conv3_b": u(ks[5], (64,), 64 * 4),
        "fc4_w": u(ks[6], (128, 256), 256),   # PyTorch Linear: [out, in]
        "fc4_b": u(ks[7], (128,), 256),
        "fc5_w": u(ks[8], (num_actions, 128), 128),
        "fc5_b": u(ks[9], (num_actions,), 128),
    }


def _ref_forward(params, x):
    def conv(x, w, b, stride, padding):
        y = jax.lax.conv_general_dilated(
            x, w, window_strides=(stride, stride),
            padding=[(padding, padding), (padding, padding)],
            dimension_numbers=("NCHW", "OIHW", "NCHW"))
        return y + b[None, :, None, None]
    x = jax.nn.relu(conv(x, params["conv1_w"], params["conv1_b"], 2, 1))
    x = jax.nn.relu(conv(x, params["conv2_w"], params["conv2_b"], 1, 0))
    x = jax.nn.relu(conv(x, params["conv3_w"], params["conv3_b"], 1, 0))
    x = x.reshape(x.shape[0], -1)
    x = jax.nn.relu(x @ params["fc4_w"].T + params["fc4_b"])
    return x @ params["fc5_w"].T + params["fc5_b"]


if __name__ == "__main__":
    num_actions = 6
    key = jax.random.PRNGKey(0)
    k_params, k_x = jax.random.split(key)
    params = init_dqn_params(k_params, num_actions, in_channels=4)
    # 8x8 frames so conv3 output is 64*2*2 = 256, matching fc4's input size.
    x = jax.random.normal(k_x, (2, 4, 8, 8), jnp.float32)

    fused = prepare_fused_params(params, in_hw=(8, 8))

    out = jax.block_until_ready(
        dqn_forward_fused(fused, x, num_actions=num_actions))
    ref = jax.block_until_ready(_ref_forward(params, x))

    assert out.shape == (2, num_actions), out.shape
    max_err = float(jnp.max(jnp.abs(out - ref)))
    # bf16 MXU operands (f32 accumulation) -> looser tolerance than pure f32.
    assert jnp.allclose(out, ref, atol=2e-2, rtol=2e-2), ("mismatch", max_err)
    print("KERNEL_OK")
</pallas_src>

<mosaic_0001>
module attributes {stable_mosaic.version = 11 : i64} {
  func.func @_dqn_fused_kernel(%arg0: i32, %arg1: memref<2x256xbf16, #tpu.memory_space<vmem>>, %arg2: memref<256x512xbf16, #tpu.memory_space<vmem>>, %arg3: memref<1x512xf32, #tpu.memory_space<vmem>>, %arg4: memref<512x640xbf16, #tpu.memory_space<vmem>>, %arg5: memref<1x640xf32, #tpu.memory_space<vmem>>, %arg6: memref<640x256xbf16, #tpu.memory_space<vmem>>, %arg7: memref<1x256xf32, #tpu.memory_space<vmem>>, %arg8: memref<256x128xbf16, #tpu.memory_space<vmem>>, %arg9: memref<1x128xf32, #tpu.memory_space<vmem>>, %arg10: memref<128x128xbf16, #tpu.memory_space<vmem>>, %arg11: memref<1x128xf32, #tpu.memory_space<vmem>>, %arg12: memref<2x128xf32, #tpu.memory_space<vmem>>) attributes {dimension_semantics = [#tpu.dimension_semantics<parallel>], iteration_bounds = array<i64: 1>, scalar_prefetch = 0 : i64, scratch_operands = 0 : i64, tpu.core_type = #tpu.core_type<tc>, window_params = [{transform_indices = @transform_0, window_bounds = array<i64: 2, 256>}, {pipeline_mode = #tpu.pipeline_mode<synchronous>, transform_indices = @transform_1, window_bounds = array<i64: 256, 512>}, {pipeline_mode = #tpu.pipeline_mode<synchronous>, transform_indices = @transform_2, window_bounds = array<i64: 1, 512>}, {pipeline_mode = #tpu.pipeline_mode<synchronous>, transform_indices = @transform_3, window_bounds = array<i64: 512, 640>}, {pipeline_mode = #tpu.pipeline_mode<synchronous>, transform_indices = @transform_4, window_bounds = array<i64: 1, 640>}, {pipeline_mode = #tpu.pipeline_mode<synchronous>, transform_indices = @transform_5, window_bounds = array<i64: 640, 256>}, {pipeline_mode = #tpu.pipeline_mode<synchronous>, transform_indices = @transform_6, window_bounds = array<i64: 1, 256>}, {pipeline_mode = #tpu.pipeline_mode<synchronous>, transform_indices = @transform_7, window_bounds = array<i64: 256, 128>}, {pipeline_mode = #tpu.pipeline_mode<synchronous>, transform_indices = @transform_8, window_bounds = array<i64: 1, 128>}, {pipeline_mode = #tpu.pipeline_mode<synchronous>, transform_indices = @transform_9, window_bounds = array<i64: 128, 128>}, {pipeline_mode = #tpu.pipeline_mode<synchronous>, transform_indices = @transform_10, window_bounds = array<i64: 1, 128>}, {transform_indices = @transform_11, window_bounds = array<i64: 2, 128>}]} {
    %c0 = arith.constant 0 : index
    %c0_0 = arith.constant 0 : index
    %0 = vector.load %arg1[%c0, %c0_0] : memref<2x256xbf16, #tpu.memory_space<vmem>>, vector<2x256xbf16>
    %c0_1 = arith.constant 0 : index
    %c0_2 = arith.constant 0 : index
    %1 = vector.load %arg2[%c0_1, %c0_2] : memref<256x512xbf16, #tpu.memory_space<vmem>>, vector<256x512xbf16>
    %cst = arith.constant dense<0.000000e+00> : vector<2x512xf32>
    %2 = tpu.matmul %0, %1, %cst {dimension_numbers = #tpu.dot_dimension_numbers<[1], [0], [0], [1], [0, 0, 1, 1], [], []>} : vector<2x256xbf16>, vector<256x512xbf16>, vector<2x512xf32> -> vector<2x512xf32>
    %c0_3 = arith.constant 0 : index
    %c0_4 = arith.constant 0 : index
    %3 = vector.load %arg3[%c0_3, %c0_4] : memref<1x512xf32, #tpu.memory_space<vmem>>, vector<1x512xf32>
    %4 = vector.broadcast %3 : vector<1x512xf32> to vector<2x512xf32>
    %5 = arith.addf %2, %4 : vector<2x512xf32>
    %cst_5 = arith.constant 0.000000e+00 : f32
    %6 = vector.broadcast %cst_5 : f32 to vector<2x512xf32>
    %7 = arith.maximumf %5, %6 : vector<2x512xf32>
    %8 = arith.truncf %7 : vector<2x512xf32> to vector<2x512xbf16>
    %c0_6 = arith.constant 0 : index
    %c0_7 = arith.constant 0 : index
    %9 = vector.load %arg4[%c0_6, %c0_7] : memref<512x640xbf16, #tpu.memory_space<vmem>>, vector<512x640xbf16>
    %cst_8 = arith.constant dense<0.000000e+00> : vector<2x640xf32>
    %10 = tpu.matmul %8, %9, %cst_8 {dimension_numbers = #tpu.dot_dimension_numbers<[1], [0], [0], [1], [0, 0, 1, 1], [], []>} : vector<2x512xbf16>, vector<512x640xbf16>, vector<2x640xf32> -> vector<2x640xf32>
    %c0_9 = arith.constant 0 : index
    %c0_10 = arith.constant 0 : index
    %11 = vector.load %arg5[%c0_9, %c0_10] : memref<1x640xf32, #tpu.memory_space<vmem>>, vector<1x640xf32>
    %12 = vector.broadcast %11 : vector<1x640xf32> to vector<2x640xf32>
    %13 = arith.addf %10, %12 : vector<2x640xf32>
    %cst_11 = arith.constant 0.000000e+00 : f32
    %14 = vector.broadcast %cst_11 : f32 to vector<2x640xf32>
    %15 = arith.maximumf %13, %14 : vector<2x640xf32>
    %16 = arith.truncf %15 : vector<2x640xf32> to vector<2x640xbf16>
    %c0_12 = arith.constant 0 : index
    %c0_13 = arith.constant 0 : index
    %17 = vector.load %arg6[%c0_12, %c0_13] : memref<640x256xbf16, #tpu.memory_space<vmem>>, vector<640x256xbf16>
    %cst_14 = arith.constant dense<0.000000e+00> : vector<2x256xf32>
    %18 = tpu.matmul %16, %17, %cst_14 {dimension_numbers = #tpu.dot_dimension_numbers<[1], [0], [0], [1], [0, 0, 1, 1], [], []>} : vector<2x640xbf16>, vector<640x256xbf16>, vector<2x256xf32> -> vector<2x256xf32>
    %c0_15 = arith.constant 0 : index
    %c0_16 = arith.constant 0 : index
    %19 = vector.load %arg7[%c0_15, %c0_16] : memref<1x256xf32, #tpu.memory_space<vmem>>, vector<1x256xf32>
    %20 = vector.broadcast %19 : vector<1x256xf32> to vector<2x256xf32>
    %21 = arith.addf %18, %20 : vector<2x256xf32>
    %cst_17 = arith.constant 0.000000e+00 : f32
    %22 = vector.broadcast %cst_17 : f32 to vector<2x256xf32>
    %23 = arith.maximumf %21, %22 : vector<2x256xf32>
    %24 = arith.truncf %23 : vector<2x256xf32> to vector<2x256xbf16>
    %c0_18 = arith.constant 0 : index
    %c0_19 = arith.constant 0 : index
    %25 = vector.load %arg8[%c0_18, %c0_19] : memref<256x128xbf16, #tpu.memory_space<vmem>>, vector<256x128xbf16>
    %cst_20 = arith.constant dense<0.000000e+00> : vector<2x128xf32>
    %26 = tpu.matmul %24, %25, %cst_20 {dimension_numbers = #tpu.dot_dimension_numbers<[1], [0], [0], [1], [0, 0, 1, 1], [], []>} : vector<2x256xbf16>, vector<256x128xbf16>, vector<2x128xf32> -> vector<2x128xf32>
    %c0_21 = arith.constant 0 : index
    %c0_22 = arith.constant 0 : index
    %27 = vector.load %arg9[%c0_21, %c0_22] : memref<1x128xf32, #tpu.memory_space<vmem>>, vector<1x128xf32>
    %28 = vector.broadcast %27 : vector<1x128xf32> to vector<2x128xf32>
    %29 = arith.addf %26, %28 : vector<2x128xf32>
    %cst_23 = arith.constant 0.000000e+00 : f32
    %30 = vector.broadcast %cst_23 : f32 to vector<2x128xf32>
    %31 = arith.maximumf %29, %30 : vector<2x128xf32>
    %32 = arith.truncf %31 : vector<2x128xf32> to vector<2x128xbf16>
    %c0_24 = arith.constant 0 : index
    %c0_25 = arith.constant 0 : index
    %33 = vector.load %arg10[%c0_24, %c0_25] : memref<128x128xbf16, #tpu.memory_space<vmem>>, vector<128x128xbf16>
    %cst_26 = arith.constant dense<0.000000e+00> : vector<2x128xf32>
    %34 = tpu.matmul %32, %33, %cst_26 {dimension_numbers = #tpu.dot_dimension_numbers<[1], [0], [0], [1], [0, 0, 1, 1], [], []>} : vector<2x128xbf16>, vector<128x128xbf16>, vector<2x128xf32> -> vector<2x128xf32>
    %c0_27 = arith.constant 0 : index
    %c0_28 = arith.constant 0 : index
    %35 = vector.load %arg11[%c0_27, %c0_28] : memref<1x128xf32, #tpu.memory_space<vmem>>, vector<1x128xf32>
    %36 = vector.broadcast %35 : vector<1x128xf32> to vector<2x128xf32>
    %37 = arith.addf %34, %36 : vector<2x128xf32>
    %c0_29 = arith.constant 0 : index
    %c0_30 = arith.constant 0 : index
    %38 = vector.load %arg12[%c0_29, %c0_30] : memref<2x128xf32, #tpu.memory_space<vmem>>, vector<2x128xf32>
    tpu.vector_store %arg12[%c0_29, %c0_30], %37 {strides = array<i32>} : memref<2x128xf32, #tpu.memory_space<vmem>>, vector<2x128xf32>,
    return
  }
  func.func @transform_0(%arg0: i32) -> (i32, i32) {
    %c0_i32 = arith.constant 0 : i32
    %c0_i32_0 = arith.constant 0 : i32
    return %arg0, %c0_i32 : i32, i32
  }
  func.func @transform_1(%arg0: i32) -> (i32, i32) {
    %c0_i32 = arith.constant 0 : i32
    %c0_i32_0 = arith.constant 0 : i32
    %c0_i32_1 = arith.constant 0 : i32
    return %c0_i32, %c0_i32_0 : i32, i32
  }
  func.func @transform_2(%arg0: i32) -> (i32, i32) {
    %c0_i32 = arith.constant 0 : i32
    %c0_i32_0 = arith.constant 0 : i32
    %c0_i32_1 = arith.constant 0 : i32
    return %c0_i32, %c0_i32_0 : i32, i32
  }
  func.func @transform_3(%arg0: i32) -> (i32, i32) {
    %c0_i32 = arith.constant 0 : i32
    %c0_i32_0 = arith.constant 0 : i32
    %c0_i32_1 = arith.constant 0 : i32
    return %c0_i32, %c0_i32_0 : i32, i32
  }
  func.func @transform_4(%arg0: i32) -> (i32, i32) {
    %c0_i32 = arith.constant 0 : i32
    %c0_i32_0 = arith.constant 0 : i32
    %c0_i32_1 = arith.constant 0 : i32
    return %c0_i32, %c0_i32_0 : i32, i32
  }
  func.func @transform_5(%arg0: i32) -> (i32, i32) {
    %c0_i32 = arith.constant 0 : i32
    %c0_i32_0 = arith.constant 0 : i32
    %c0_i32_1 = arith.constant 0 : i32
    return %c0_i32, %c0_i32_0 : i32, i32
  }
  func.func @transform_6(%arg0: i32) -> (i32, i32) {
    %c0_i32 = arith.constant 0 : i32
    %c0_i32_0 = arith.constant 0 : i32
    %c0_i32_1 = arith.constant 0 : i32
    return %c0_i32, %c0_i32_0 : i32, i32
  }
  func.func @transform_7(%arg0: i32) -> (i32, i32) {
    %c0_i32 = arith.constant 0 : i32
    %c0_i32_0 = arith.constant 0 : i32
    %c0_i32_1 = arith.constant 0 : i32
    return %c0_i32, %c0_i32_0 : i32, i32
  }
  func.func @transform_8(%arg0: i32) -> (i32, i32) {
    %c0_i32 = arith.constant 0 : i32
    %c0_i32_0 = arith.constant 0 : i32
    %c0_i32_1 = arith.constant 0 : i32
    return %c0_i32, %c0_i32_0 : i32, i32
  }
  func.func @transform_9(%arg0: i32) -> (i32, i32) {
    %c0_i32 = arith.constant 0 : i32
    %c0_i32_0 = arith.constant 0 : i32
    %c0_i32_1 = arith.constant 0 : i32
    return %c0_i32, %c0_i32_0 : i32, i32
  }
  func.func @transform_10(%arg0: i32) -> (i32, i32) {
    %c0_i32 = arith.constant 0 : i32
    %c0_i32_0 = arith.constant 0 : i32
    %c0_i32_1 = arith.constant 0 : i32
    return %c0_i32, %c0_i32_0 : i32, i32
  }
  func.func @transform_11(%arg0: i32) -> (i32, i32) {
    %c0_i32 = arith.constant 0 : i32
    %c0_i32_0 = arith.constant 0 : i32
    return %arg0, %c0_i32 : i32, i32
  }
}

</mosaic_0001>

<llo_original>
// kernel: dqn_forward_fused.1
$region0: #{dqn_forward_fused.1}
  #allocation0 [shape = 'u32[]', space=smem, size = 0x4, offset = 0x4, fixed_abs, tag = 'smem constant byte address 0x4 - core index']
  #allocation1 [shape = 'u32[144,128]{1,0:T(1,128)}', space=vmem, size = 0x12000, scoped, tag = 'internal scratch']
  %s0 = inlined_call_operand.vmem [shape: bf16[2,256], index: 0, kind: input, shape index: {}]
  %s1 = inlined_call_operand.hbm [shape: bf16[256,512], index: 1, kind: input, shape index: {}]
  %s2 = inlined_call_operand.vmem [shape: f32[1,512], index: 2, kind: input, shape index: {}]
  %s3 = inlined_call_operand.hbm [shape: bf16[512,640], index: 3, kind: input, shape index: {}]
  %s4 = inlined_call_operand.vmem [shape: f32[1,640], index: 4, kind: input, shape index: {}]
  %s5 = inlined_call_operand.hbm [shape: bf16[640,256], index: 5, kind: input, shape index: {}]
  %s6 = inlined_call_operand.vmem [shape: f32[1,256], index: 6, kind: input, shape index: {}]
  %s7 = inlined_call_operand.vmem [shape: bf16[256,128], index: 7, kind: input, shape index: {}]
  %s8 = inlined_call_operand.vmem [shape: f32[1,128], index: 8, kind: input, shape index: {}]
  %s9 = inlined_call_operand.hbm [shape: bf16[128,128], index: 9, kind: input, shape index: {}]
  %s10 = inlined_call_operand.vmem [shape: f32[1,128], index: 10, kind: input, shape index: {}]
  %s11 = inlined_call_operand.hbm [shape: f32[2,128], index: 11, kind: output, shape index: {}]
  %s12 = sld [smem:[#allocation0]]
  $region70: #{dqn_forward_fused.1} parent=0
    _
  %s14 = ssub.s32 1, %s12
  %s15 = scalar_select 0, %s14, %s12
  $region1: #{dqn_forward_fused.1} parent=0
    #allocation2 [shape = 'u8[262144]{0}', space=vmem, size = 0x40000, scoped, tag = 'input window, operand 1, single buffered']
    #allocation3 [shape = 's32[1]{0}', space=sflag, size = 0x4, scoped, tag = 'scoped memory for dqn_forward_fused.1']
    #allocation4 [shape = 's32[1]{0}', space=sflag, size = 0x4, scoped, tag = 'scoped memory for dqn_forward_fused.1']
    #allocation5 [shape = 'u8[655360]{0}', space=vmem, size = 0xa0000, scoped, tag = 'input window, operand 3, single buffered']
    #allocation6 [shape = 's32[1]{0}', space=sflag, size = 0x4, scoped, tag = 'scoped memory for dqn_forward_fused.1']
    #allocation7 [shape = 'u8[327680]{0}', space=vmem, size = 0x50000, scoped, tag = 'input window, operand 5, single buffered']
    #allocation8 [shape = 'u8[32768]{0}', space=vmem, size = 0x8000, scoped, tag = 'input window, operand 9, single buffered']
    #allocation9 [shape = 's32[1]{0}', space=sflag, size = 0x4, scoped, tag = 'scoped memory for dqn_forward_fused.1']
    #allocation10 [shape = 'u8[1024]{0}', space=vmem, size = 0x400, scoped, tag = 'output window, operand 0, single buffered']
    %16 = vsyncpa [#allocation3], 0
    %17 = vsyncpa [#allocation6], 0
    %18 = vsyncpa [#allocation9], 0
    %19 = vsyncpa [#allocation4], 0
    // Predicated region
    $region2: #{dqn_forward_fused.1} parent=1 // pred_check
      _
    $region3: #{dqn_forward_fused.1} parent=1 // pred_check_branch
      %21 = sbr.rel (0) target = $region5
    $region4: #{dqn_forward_fused.1} parent=1 // pred_region
      _
    $region5: #{dqn_forward_fused.1} parent=1 // pred_fallthru
      _
    // Predicated region
    $region6: #{dqn_forward_fused.1} parent=1 // pred_check
      _
    $region7: #{dqn_forward_fused.1} parent=1 // pred_check_branch
      %23 = sbr.rel (0) target = $region9
    $region8: #{dqn_forward_fused.1} parent=1 // pred_region
      %s25 = ssub.s32 8192, 8192
      %26 = vsyncadd [#allocation3], %s25
      %s27 = sshll.u32 [#allocation2], 4
      %s28 = int_to_ptr.vmem [resolvable:$true] %s27
      %33 = dma.hbm_to_vmem [thread:$0]  %s1, 8192, %s28, [#allocation3], 256, 256, 16
    $region9: #{dqn_forward_fused.1} parent=1 // pred_fallthru
      _
    // Predicated region
    $region10: #{dqn_forward_fused.1} parent=1 // pred_check
      _
    $region11: #{dqn_forward_fused.1} parent=1 // pred_check_branch
      %35 = sbr.rel (0) target = $region13
    $region12: #{dqn_forward_fused.1} parent=1 // pred_region
      _
    $region13: #{dqn_forward_fused.1} parent=1 // pred_fallthru
      _
    // Predicated region
    $region14: #{dqn_forward_fused.1} parent=1 // pred_check
      _
    $region15: #{dqn_forward_fused.1} parent=1 // pred_check_branch
      %37 = sbr.rel (0) target = $region17
    $region16: #{dqn_forward_fused.1} parent=1 // pred_region
      %s39 = ssub.s32 20480, 20480
      %40 = vsyncadd [#allocation6], %s39
      %s41 = sshll.u32 [#allocation5], 4
      %s42 = int_to_ptr.vmem [resolvable:$true] %s41
      %47 = dma.hbm_to_vmem [thread:$0]  %s3, 20480, %s42, [#allocation6], 320, 320, 20
    $region17: #{dqn_forward_fused.1} parent=1 // pred_fallthru
      _
    // Predicated region
    $region18: #{dqn_forward_fused.1} parent=1 // pred_check
      _
    $region19: #{dqn_forward_fused.1} parent=1 // pred_check_branch
      %49 = sbr.rel (0) target = $region21
    $region20: #{dqn_forward_fused.1} parent=1 // pred_region
      _
    $region21: #{dqn_forward_fused.1} parent=1 // pred_fallthru
      _
    // Predicated region
    $region22: #{dqn_forward_fused.1} parent=1 // pred_check
      _
    $region23: #{dqn_forward_fused.1} parent=1 // pred_check_branch
      %51 = sbr.rel (0) target = $region25
    $region24: #{dqn_forward_fused.1} parent=1 // pred_region
      %s53 = ssub.s32 10240, 10240
      %54 = vsyncadd [#allocation6], %s53
      %s55 = sshll.u32 [#allocation7], 4
      %s56 = int_to_ptr.vmem [resolvable:$true] %s55
      %61 = dma.hbm_to_vmem [thread:$0]  %s5, 10240, %s56, [#allocation6], 128, 128, 8
    $region25: #{dqn_forward_fused.1} parent=1 // pred_fallthru
      _
    // Predicated region
    $region26: #{dqn_forward_fused.1} parent=1 // pred_check
      _
    $region27: #{dqn_forward_fused.1} parent=1 // pred_check_branch
      %63 = sbr.rel (0) target = $region29
    $region28: #{dqn_forward_fused.1} parent=1 // pred_region
      _
    $region29: #{dqn_forward_fused.1} parent=1 // pred_fallthru
      _
    // Predicated region
    $region30: #{dqn_forward_fused.1} parent=1 // pred_check
      _
    $region31: #{dqn_forward_fused.1} parent=1 // pred_check_branch
      %65 = sbr.rel (0) target = $region33
    $region32: #{dqn_forward_fused.1} parent=1 // pred_region
      _
    $region33: #{dqn_forward_fused.1} parent=1 // pred_fallthru
      _
    // Predicated region
    $region34: #{dqn_forward_fused.1} parent=1 // pred_check
      _
    $region35: #{dqn_forward_fused.1} parent=1 // pred_check_branch
      %67 = sbr.rel (0) target = $region37
    $region36: #{dqn_forward_fused.1} parent=1 // pred_region
      _
    $region37: #{dqn_forward_fused.1} parent=1 // pred_fallthru
      _
    // Predicated region
    $region38: #{dqn_forward_fused.1} parent=1 // pred_check
      _
    $region39: #{dqn_forward_fused.1} parent=1 // pred_check_branch
      %69 = sbr.rel (0) target = $region41
    $region40: #{dqn_forward_fused.1} parent=1 // pred_region
      %s71 = ssub.s32 1024, 1024
      %72 = vsyncadd [#allocation9], %s71
      %s73 = sshll.u32 [#allocation8], 4
      %s74 = int_to_ptr.vmem [resolvable:$true] %s73
      %79 = dma.hbm_to_vmem [thread:$0]  %s9, 1024, %s74, [#allocation9], 64, 64, 4
    $region41: #{dqn_forward_fused.1} parent=1 // pred_fallthru
      _
    // Predicated region
    $region42: #{dqn_forward_fused.1} parent=1 // pred_check
      _
    $region43: #{dqn_forward_fused.1} parent=1 // pred_check_branch
      %81 = sbr.rel (0) target = $region45
    $region44: #{dqn_forward_fused.1} parent=1 // pred_region
      _
    $region45: #{dqn_forward_fused.1} parent=1 // pred_fallthru
      _
    // Predicated region
    $region46: #{dqn_forward_fused.1} parent=1 // pred_check
      _
    $region47: #{dqn_forward_fused.1} parent=1 // pred_check_branch
      %83 = sbr.rel (0) target = $region49
    $region48: #{dqn_forward_fused.1} parent=1 // pred_region
      %84 = dma.done [#allocation3], 8192
    $region49: #{dqn_forward_fused.1} parent=1 // pred_fallthru
      _
    // Predicated region
    $region50: #{dqn_forward_fused.1} parent=1 // pred_check
      _
    $region51: #{dqn_forward_fused.1} parent=1 // pred_check_branch
      %86 = sbr.rel (0) target = $region53
    $region52: #{dqn_forward_fused.1} parent=1 // pred_region
      %87 = dma.done [#allocation6], 20480
    $region53: #{dqn_forward_fused.1} parent=1 // pred_fallthru
      _
    // Predicated region
    $region54: #{dqn_forward_fused.1} parent=1 // pred_check
      _
    $region55: #{dqn_forward_fused.1} parent=1 // pred_check_branch
      %89 = sbr.rel (0) target = $region57
    $region56: #{dqn_forward_fused.1} parent=1 // pred_region
      %90 = dma.done [#allocation6], 10240
    $region57: #{dqn_forward_fused.1} parent=1 // pred_fallthru
      _
    // Predicated region
    $region58: #{dqn_forward_fused.1} parent=1 // pred_check
      _
    $region59: #{dqn_forward_fused.1} parent=1 // pred_check_branch
      %92 = sbr.rel (0) target = $region61
    $region60: #{dqn_forward_fused.1} parent=1 // pred_region
      %93 = dma.done [#allocation9], 1024
    $region61: #{dqn_forward_fused.1} parent=1 // pred_fallthru
      _
    %v95 = vld [vmem:[%s0] sm:$0x3]
    %v96 = vld [vmem:[#allocation2] sm:$0xff]
    %v97 = vld [vmem:[#allocation2 + $0x8] sm:$0xff]
    %v98 = vld [vmem:[#allocation2 + $0x10] sm:$0xff]
    %v99 = vld [vmem:[#allocation2 + $0x18] sm:$0xff]
    %v100 = vld [vmem:[#allocation2 + $0x20] sm:$0xff]
    %v101 = vld [vmem:[#allocation2 + $0x28] sm:$0xff]
    %v102 = vld [vmem:[#allocation2 + $0x30] sm:$0xff]
    %v103 = vld [vmem:[#allocation2 + $0x38] sm:$0xff]
    %v104 = vld [vmem:[#allocation2 + $0x40] sm:$0xff]
    %v105 = vld [vmem:[#allocation2 + $0x48] sm:$0xff]
    %v106 = vld [vmem:[#allocation2 + $0x50] sm:$0xff]
    %v107 = vld [vmem:[#allocation2 + $0x58] sm:$0xff]
    %v108 = vld [vmem:[#allocation2 + $0x60] sm:$0xff]
    %v109 = vld [vmem:[#allocation2 + $0x68] sm:$0xff]
    %v110 = vld [vmem:[#allocation2 + $0x70] sm:$0xff]
    %v111 = vld [vmem:[#allocation2 + $0x78] sm:$0xff]
    %v112 = vld [vmem:[#allocation2 + $0x80] sm:$0xff]
    %v113 = vld [vmem:[#allocation2 + $0x88] sm:$0xff]
    %v114 = vld [vmem:[#allocation2 + $0x90] sm:$0xff]
    %v115 = vld [vmem:[#allocation2 + $0x98] sm:$0xff]
    %v116 = vld [vmem:[#allocation2 + $0xa0] sm:$0xff]
    %v117 = vld [vmem:[#allocation2 + $0xa8] sm:$0xff]
    %v118 = vld [vmem:[#allocation2 + $0xb0] sm:$0xff]
    %v119 = vld [vmem:[#allocation2 + $0xb8] sm:$0xff]
    %v120 = vld [vmem:[#allocation2 + $0xc0] sm:$0xff]
    %v121 = vld [vmem:[#allocation2 + $0xc8] sm:$0xff]
    %v122 = vld [vmem:[#allocation2 + $0xd0] sm:$0xff]
    %v123 = vld [vmem:[#allocation2 + $0xd8] sm:$0xff]
    %v124 = vld [vmem:[#allocation2 + $0xe0] sm:$0xff]
    %v125 = vld [vmem:[#allocation2 + $0xe8] sm:$0xff]
    %v126 = vld [vmem:[#allocation2 + $0xf0] sm:$0xff]
    %v127 = vld [vmem:[#allocation2 + $0xf8] sm:$0xff]
    %v128 = vld [vmem:[#allocation2 + $0x100] sm:$0xff]
    %v129 = vld [vmem:[#allocation2 + $0x108] sm:$0xff]
    %v130 = vld [vmem:[#allocation2 + $0x110] sm:$0xff]
    %v131 = vld [vmem:[#allocation2 + $0x118] sm:$0xff]
    %v132 = vld [vmem:[#allocation2 + $0x120] sm:$0xff]
    %v133 = vld [vmem:[#allocation2 + $0x128] sm:$0xff]
    %v134 = vld [vmem:[#allocation2 + $0x130] sm:$0xff]
    %v135 = vld [vmem:[#allocation2 + $0x138] sm:$0xff]
    %v136 = vld [vmem:[#allocation2 + $0x140] sm:$0xff]
    %v137 = vld [vmem:[#allocation2 + $0x148] sm:$0xff]
    %v138 = vld [vmem:[#allocation2 + $0x150] sm:$0xff]
    %v139 = vld [vmem:[#allocation2 + $0x158] sm:$0xff]
    %v140 = vld [vmem:[#allocation2 + $0x160] sm:$0xff]
    %v141 = vld [vmem:[#allocation2 + $0x168] sm:$0xff]
    %v142 = vld [vmem:[#allocation2 + $0x170] sm:$0xff]
    %v143 = vld [vmem:[#allocation2 + $0x178] sm:$0xff]
    %v144 = vld [vmem:[#allocation2 + $0x180] sm:$0xff]
    %v145 = vld [vmem:[#allocation2 + $0x188] sm:$0xff]
    %v146 = vld [vmem:[#allocation2 + $0x190] sm:$0xff]
    %v147 = vld [vmem:[#allocation2 + $0x198] sm:$0xff]
    %v148 = vld [vmem:[#allocation2 + $0x1a0] sm:$0xff]
    %v149 = vld [vmem:[#allocation2 + $0x1a8] sm:$0xff]
    %v150 = vld [vmem:[#allocation2 + $0x1b0] sm:$0xff]
    %v151 = vld [vmem:[#allocation2 + $0x1b8] sm:$0xff]
    %v152 = vld [vmem:[#allocation2 + $0x1c0] sm:$0xff]
    %v153 = vld [vmem:[#allocation2 + $0x1c8] sm:$0xff]
    %v154 = vld [vmem:[#allocation2 + $0x1d0] sm:$0xff]
    %v155 = vld [vmem:[#allocation2 + $0x1d8] sm:$0xff]
    %v156 = vld [vmem:[#allocation2 + $0x1e0] sm:$0xff]
    %v157 = vld [vmem:[#allocation2 + $0x1e8] sm:$0xff]
    %v158 = vld [vmem:[#allocation2 + $0x1f0] sm:$0xff]
    %v159 = vld [vmem:[#allocation2 + $0x1f8] sm:$0xff]
    %v160 = vld [vmem:[%s2] sm:$0xf]
    %v162 = vlaneseq
    %v163 = vshrl.u32 %v162, 7
    %v164 = vsub.s32 0, %v163
    %v165 = vrot.slane %v160, %v164
    %v166 = vlaneseq
    %v167 = vshrl.u32 %v166, 7
    %v168 = vsub.s32 1, %v167
    %v169 = vrot.slane %v160, %v168
    %v170 = vlaneseq
    %v171 = vshrl.u32 %v170, 7
    %v172 = vsub.s32 2, %v171
    %v173 = vrot.slane %v160, %v172
    %v174 = vlaneseq
    %v175 = vshrl.u32 %v174, 7
    %v176 = vsub.s32 3, %v175
    %v177 = vrot.slane %v160, %v176
    %v184 = vunpack.c.l.s4 1966171168
    %v185 = vunpack.c.0.s8 %v184
    %v186 = vlaneseq
    %v187 = vshrl.u32 %v186, 7
    %v188 = vsub.s32 %v185, %v187
    %v189 = vrot.slane %v95, %v188
    %v190 = vcombine.high %v189, %v189
    %v192 = vunpack.c.l.s4 1966171168
    %v193 = vunpack.c.0.s8 %v192
    %v194 = vlaneseq
    %v195 = vshrl.u32 %v194, 7
    %v196 = vsub.s32 %v193, %v195
    %v197 = vrot.slane %v189, %v196
    %v199 = vunpack.c.l.s4 1966171168
    %v200 = vunpack.c.0.s8 %v199
    %v201 = vlaneseq
    %v202 = vshrl.u32 %v201, 7
    %v203 = vsub.s32 %v200, %v202
    %v204 = vrot.slane %v190, %v203
    %v271 = vunpack.c.l.b16 %v96
    %v272 = vunpack.c.h.b16 %v96
    %v273 = vunpack.c.l.b16 %v97
    %v274 = vunpack.c.h.b16 %v97
    %v275 = vunpack.c.l.b16 %v98
    %v276 = vunpack.c.h.b16 %v98
    %v277 = vunpack.c.l.b16 %v99
    %v278 = vunpack.c.h.b16 %v99
    %v279 = vunpack.c.l.b16 %v100
    %v280 = vunpack.c.h.b16 %v100
    %v281 = vunpack.c.l.b16 %v101
    %v282 = vunpack.c.h.b16 %v101
    %v283 = vunpack.c.l.b16 %v102
    %v284 = vunpack.c.h.b16 %v102
    %v285 = vunpack.c.l.b16 %v103
    %v286 = vunpack.c.h.b16 %v103
    %v287 = vunpack.c.l.b16 %v104
    %v288 = vunpack.c.h.b16 %v104
    %v289 = vunpack.c.l.b16 %v105
    %v290 = vunpack.c.h.b16 %v105
    %v291 = vunpack.c.l.b16 %v106
    %v292 = vunpack.c.h.b16 %v106
    %v293 = vunpack.c.l.b16 %v107
    %v294 = vunpack.c.h.b16 %v107
    %v295 = vunpack.c.l.b16 %v108
    %v296 = vunpack.c.h.b16 %v108
    %v297 = vunpack.c.l.b16 %v109
    %v298 = vunpack.c.h.b16 %v109
    %v299 = vunpack.c.l.b16 %v110
    %v300 = vunpack.c.h.b16 %v110
    %v301 = vunpack.c.l.b16 %v111
    %v302 = vunpack.c.h.b16 %v111
    %v303 = vunpack.c.l.b16 %v112
    %v304 = vunpack.c.h.b16 %v112
    %v305 = vunpack.c.l.b16 %v113
    %v306 = vunpack.c.h.b16 %v113
    %v307 = vunpack.c.l.b16 %v114
    %v308 = vunpack.c.h.b16 %v114
    %v309 = vunpack.c.l.b16 %v115
    %v310 = vunpack.c.h.b16 %v115
    %v311 = vunpack.c.l.b16 %v116
    %v312 = vunpack.c.h.b16 %v116
    %v313 = vunpack.c.l.b16 %v117
    %v314 = vunpack.c.h.b16 %v117
    %v315 = vunpack.c.l.b16 %v118
    %v316 = vunpack.c.h.b16 %v118
    %v317 = vunpack.c.l.b16 %v119
    %v318 = vunpack.c.h.b16 %v119
    %v319 = vunpack.c.l.b16 %v120
    %v320 = vunpack.c.h.b16 %v120
    %v321 = vunpack.c.l.b16 %v121
    %v322 = vunpack.c.h.b16 %v121
    %v323 = vunpack.c.l.b16 %v122
    %v324 = vunpack.c.h.b16 %v122
    %v325 = vunpack.c.l.b16 %v123
    %v326 = vunpack.c.h.b16 %v123
    %v327 = vunpack.c.l.b16 %v124
    %v328 = vunpack.c.h.b16 %v124
    %v329 = vunpack.c.l.b16 %v125
    %v330 = vunpack.c.h.b16 %v125
    %v331 = vunpack.c.l.b16 %v126
    %v332 = vunpack.c.h.b16 %v126
    %v333 = vunpack.c.l.b16 %v127
    %v334 = vunpack.c.h.b16 %v127
    %v335 = vunpack.c.l.b16 %v128
    %v336 = vunpack.c.h.b16 %v128
    %v337 = vunpack.c.l.b16 %v129
    %v338 = vunpack.c.h.b16 %v129
    %v339 = vunpack.c.l.b16 %v130
    %v340 = vunpack.c.h.b16 %v130
    %v341 = vunpack.c.l.b16 %v131
    %v342 = vunpack.c.h.b16 %v131
    %v343 = vunpack.c.l.b16 %v132
    %v344 = vunpack.c.h.b16 %v132
    %v345 = vunpack.c.l.b16 %v133
    %v346 = vunpack.c.h.b16 %v133
    %v347 = vunpack.c.l.b16 %v134
    %v348 = vunpack.c.h.b16 %v134
    %v349 = vunpack.c.l.b16 %v135
    %v350 = vunpack.c.h.b16 %v135
    %v351 = vunpack.c.l.b16 %v136
    %v352 = vunpack.c.h.b16 %v136
    %v353 = vunpack.c.l.b16 %v137
    %v354 = vunpack.c.h.b16 %v137
    %v355 = vunpack.c.l.b16 %v138
    %v356 = vunpack.c.h.b16 %v138
    %v357 = vunpack.c.l.b16 %v139
    %v358 = vunpack.c.h.b16 %v139
    %v359 = vunpack.c.l.b16 %v140
    %v360 = vunpack.c.h.b16 %v140
    %v361 = vunpack.c.l.b16 %v141
    %v362 = vunpack.c.h.b16 %v141
    %v363 = vunpack.c.l.b16 %v142
    %v364 = vunpack.c.h.b16 %v142
    %v365 = vunpack.c.l.b16 %v143
    %v366 = vunpack.c.h.b16 %v143
    %v367 = vunpack.c.l.b16 %v144
    %v368 = vunpack.c.h.b16 %v144
    %v369 = vunpack.c.l.b16 %v145
    %v370 = vunpack.c.h.b16 %v145
    %v371 = vunpack.c.l.b16 %v146
    %v372 = vunpack.c.h.b16 %v146
    %v373 = vunpack.c.l.b16 %v147
    %v374 = vunpack.c.h.b16 %v147
    %v375 = vunpack.c.l.b16 %v148
    %v376 = vunpack.c.h.b16 %v148
    %v377 = vunpack.c.l.b16 %v149
    %v378 = vunpack.c.h.b16 %v149
    %v379 = vunpack.c.l.b16 %v150
    %v380 = vunpack.c.h.b16 %v150
    %v381 = vunpack.c.l.b16 %v151
    %v382 = vunpack.c.h.b16 %v151
    %v383 = vunpack.c.l.b16 %v152
    %v384 = vunpack.c.h.b16 %v152
    %v385 = vunpack.c.l.b16 %v153
    %v386 = vunpack.c.h.b16 %v153
    %v387 = vunpack.c.l.b16 %v154
    %v388 = vunpack.c.h.b16 %v154
    %v389 = vunpack.c.l.b16 %v155
    %v390 = vunpack.c.h.b16 %v155
    %v391 = vunpack.c.l.b16 %v156
    %v392 = vunpack.c.h.b16 %v156
    %v393 = vunpack.c.l.b16 %v157
    %v394 = vunpack.c.h.b16 %v157
    %v395 = vunpack.c.l.b16 %v158
    %v396 = vunpack.c.h.b16 %v158
    %v397 = vunpack.c.l.b16 %v159
    %v398 = vunpack.c.h.b16 %v159
    %v399 = vpack.c.b16 %v275, %v271
    %v400 = vpack.c.b16 %v276, %v272
    %v401 = vpack.c.b16 %v277, %v273
    %v402 = vpack.c.b16 %v278, %v274
    %v403 = vpack.c.b16 %v283, %v279
    %v404 = vpack.c.b16 %v284, %v280
    %v405 = vpack.c.b16 %v285, %v281
    %v406 = vpack.c.b16 %v286, %v282
    %v407 = vpack.c.b16 %v291, %v287
    %v408 = vpack.c.b16 %v292, %v288
    %v409 = vpack.c.b16 %v293, %v289
    %v410 = vpack.c.b16 %v294, %v290
    %v411 = vpack.c.b16 %v299, %v295
    %v412 = vpack.c.b16 %v300, %v296
    %v413 = vpack.c.b16 %v301, %v297
    %v414 = vpack.c.b16 %v302, %v298
    %v415 = vpack.c.b16 %v307, %v303
    %v416 = vpack.c.b16 %v308, %v304
    %v417 = vpack.c.b16 %v309, %v305
    %v418 = vpack.c.b16 %v310, %v306
    %v419 = vpack.c.b16 %v315, %v311
    %v420 = vpack.c.b16 %v316, %v312
    %v421 = vpack.c.b16 %v317, %v313
    %v422 = vpack.c.b16 %v318, %v314
    %v423 = vpack.c.b16 %v323, %v319
    %v424 = vpack.c.b16 %v324, %v320
    %v425 = vpack.c.b16 %v325, %v321
    %v426 = vpack.c.b16 %v326, %v322
    %v427 = vpack.c.b16 %v331, %v327
    %v428 = vpack.c.b16 %v332, %v328
    %v429 = vpack.c.b16 %v333, %v329
    %v430 = vpack.c.b16 %v334, %v330
    %v431 = vpack.c.b16 %v339, %v335
    %v432 = vpack.c.b16 %v340, %v336
    %v433 = vpack.c.b16 %v341, %v337
    %v434 = vpack.c.b16 %v342, %v338
    %v435 = vpack.c.b16 %v347, %v343
    %v436 = vpack.c.b16 %v348, %v344
    %v437 = vpack.c.b16 %v349, %v345
    %v438 = vpack.c.b16 %v350, %v346
    %v439 = vpack.c.b16 %v355, %v351
    %v440 = vpack.c.b16 %v356, %v352
    %v441 = vpack.c.b16 %v357, %v353
    %v442 = vpack.c.b16 %v358, %v354
    %v443 = vpack.c.b16 %v363, %v359
    %v444 = vpack.c.b16 %v364, %v360
    %v445 = vpack.c.b16 %v365, %v361
    %v446 = vpack.c.b16 %v366, %v362
    %v447 = vpack.c.b16 %v371, %v367
    %v448 = vpack.c.b16 %v372, %v368
    %v449 = vpack.c.b16 %v373, %v369
    %v450 = vpack.c.b16 %v374, %v370
    %v451 = vpack.c.b16 %v379, %v375
    %v452 = vpack.c.b16 %v380, %v376
    %v453 = vpack.c.b16 %v381, %v377
    %v454 = vpack.c.b16 %v382, %v378
    %v455 = vpack.c.b16 %v387, %v383
    %v456 = vpack.c.b16 %v388, %v384
    %v457 = vpack.c.b16 %v389, %v385
    %v458 = vpack.c.b16 %v390, %v386
    %v459 = vpack.c.b16 %v395, %v391
    %v460 = vpack.c.b16 %v396, %v392
    %v461 = vpack.c.b16 %v397, %v393
    %v462 = vpack.c.b16 %v398, %v394
    %527 = vmatprep.subr.bf16.mxu0 %v400
    %528 = vmatpush1.bf16.msra.mxu0 %v399
    %529 = vmatprep.subr.bf16.mxu0 %v404
    %530 = vmatpush1.bf16.msra.mxu0 %v403
    %531 = vmatprep.subr.bf16.mxu0 %v408
    %532 = vmatpush1.bf16.msra.mxu0 %v407
    %533 = vmatprep.subr.bf16.mxu0 %v412
    %534 = vmatpush1.bf16.msra.mxu0 %v411
    %535 = vmatprep.subr.bf16.mxu0 %v416
    %536 = vmatpush1.bf16.msra.mxu0 %v415
    %537 = vmatprep.subr.bf16.mxu0 %v420
    %538 = vmatpush1.bf16.msra.mxu0 %v419
    %539 = vmatprep.subr.bf16.mxu0 %v424
    %540 = vmatpush1.bf16.msra.mxu0 %v423
    %541 = vmatprep.subr.bf16.mxu0 %v428
    %542 = vmatpush1.bf16.msra.mxu0 %v427
    %543 = vmatprep.subr.bf16.mxu0 %v432
    %544 = vmatpush1.bf16.msra.mxu0 %v431
    %545 = vmatprep.subr.bf16.mxu0 %v436
    %546 = vmatpush1.bf16.msra.mxu0 %v435
    %547 = vmatprep.subr.bf16.mxu0 %v440
    %548 = vmatpush1.bf16.msra.mxu0 %v439
    %549 = vmatprep.subr.bf16.mxu0 %v444
    %550 = vmatpush1.bf16.msra.mxu0 %v443
    %551 = vmatprep.subr.bf16.mxu0 %v448
    %552 = vmatpush1.bf16.msra.mxu0 %v447
    %553 = vmatprep.subr.bf16.mxu0 %v452
    %554 = vmatpush1.bf16.msra.mxu0 %v451
    %555 = vmatprep.subr.bf16.mxu0 %v456
    %556 = vmatpush1.bf16.msra.mxu0 %v455
    %557 = vmatprep.subr.bf16.mxu0 %v460
    %558 = vmatpush1.bf16.msra.mxu0 %v459
    %559 = vmatprep.mubr.bf16.mxu0 %v204
    %560 = vmatmul.mubr.bf16.gmra.mrb[0].mxu0 %v197
    %v561 = vpop.f32.mrb[0].mxu0
    %v562 = vadd.f32 %v165, %v561
    %v563 = vpop.f32.mrb[0].mxu0
    %v564 = vadd.f32 %v169, %v563
    %v565 = vpop.f32.mrb[0].mxu0
    %v566 = vpop.f32.mrb[0].mxu0
    %567 = vdwg.mxu0
    %568 = vmatprep.subr.bf16.mxu0 %v402
    %569 = vmatpush1.bf16.msra.mxu0 %v401
    %570 = vmatprep.subr.bf16.mxu0 %v406
    %571 = vmatpush1.bf16.msra.mxu0 %v405
    %572 = vmatprep.subr.bf16.mxu0 %v410
    %573 = vmatpush1.bf16.msra.mxu0 %v409
    %574 = vmatprep.subr.bf16.mxu0 %v414
    %575 = vmatpush1.bf16.msra.mxu0 %v413
    %576 = vmatprep.subr.bf16.mxu0 %v418
    %577 = vmatpush1.bf16.msra.mxu0 %v417
    %578 = vmatprep.subr.bf16.mxu0 %v422
    %579 = vmatpush1.bf16.msra.mxu0 %v421
    %580 = vmatprep.subr.bf16.mxu0 %v426
    %581 = vmatpush1.bf16.msra.mxu0 %v425
    %582 = vmatprep.subr.bf16.mxu0 %v430
    %583 = vmatpush1.bf16.msra.mxu0 %v429
    %584 = vmatprep.subr.bf16.mxu0 %v434
    %585 = vmatpush1.bf16.msra.mxu0 %v433
    %586 = vmatprep.subr.bf16.mxu0 %v438
    %587 = vmatpush1.bf16.msra.mxu0 %v437
    %588 = vmatprep.subr.bf16.mxu0 %v442
    %589 = vmatpush1.bf16.msra.mxu0 %v441
    %590 = vmatprep.subr.bf16.mxu0 %v446
    %591 = vmatpush1.bf16.msra.mxu0 %v445
    %592 = vmatprep.subr.bf16.mxu0 %v450
    %593 = vmatpush1.bf16.msra.mxu0 %v449
    %594 = vmatprep.subr.bf16.mxu0 %v454
    %595 = vmatpush1.bf16.msra.mxu0 %v453
    %596 = vmatprep.subr.bf16.mxu0 %v458
    %597 = vmatpush1.bf16.msra.mxu0 %v457
    %598 = vmatprep.subr.bf16.mxu0 %v462
    %599 = vmatpush1.bf16.msra.mxu0 %v461
    %600 = vmatprep.mubr.bf16.mxu0 %v204
    %601 = vmatmul.mubr.bf16.gmra.mrb[0].mxu0 %v197
    %v602 = vpop.f32.mrb[0].mxu0
    %v603 = vadd.f32 %v173, %v602
    %v604 = vpop.f32.mrb[0].mxu0
    %v605 = vadd.f32 %v177, %v604
    %v606 = vpop.f32.mrb[0].mxu0
    %v607 = vpop.f32.mrb[0].mxu0
    %608 = vdwg.mxu0
    %v609 = vmax.f32 %v562, 0.0
    %v610 = vmax.f32 %v564, 0.0
    %v611 = vmax.f32 %v603, 0.0
    %v612 = vmax.f32 %v605, 0.0
    %v613 = vpack.c.bf16 %v609, %v609
    %v614 = vpack.c.bf16 %v610, %v610
    %v615 = vpack.c.bf16 %v611, %v611
    %v616 = vpack.c.bf16 %v612, %v612
    %v617 = vld [vmem:[#allocation5] sm:$0xff]
    %v618 = vld [vmem:[#allocation5 + $0x8] sm:$0xff]
    %v619 = vld [vmem:[#allocation5 + $0x10] sm:$0xf]
    %v620 = vld [vmem:[#allocation5 + $0x14] sm:$0xff]
    %v621 = vld [vmem:[#allocation5 + $0x1c] sm:$0xff]
    %v622 = vld [vmem:[#allocation5 + $0x24] sm:$0xf]
    %v623 = vld [vmem:[#allocation5 + $0x28] sm:$0xff]
    %v624 = vld [vmem:[#allocation5 + $0x30] sm:$0xff]
    %v625 = vld [vmem:[#allocation5 + $0x38] sm:$0xf]
    %v626 = vld [vmem:[#allocation5 + $0x3c] sm:$0xff]
    %v627 = vld [vmem:[#allocation5 + $0x44] sm:$0xff]
    %v628 = vld [vmem:[#allocation5 + $0x4c] sm:$0xf]
    %v629 = vld [vmem:[#allocation5 + $0x50] sm:$0xff]
    %v630 = vld [vmem:[#allocation5 + $0x58] sm:$0xff]
    %v631 = vld [vmem:[#allocation5 + $0x60] sm:$0xf]
    %v632 = vld [vmem:[#allocation5 + $0x64] sm:$0xff]
    %v633 = vld [vmem:[#allocation5 + $0x6c] sm:$0xff]
    %v634 = vld [vmem:[#allocation5 + $0x74] sm:$0xf]
    %v635 = vld [vmem:[#allocation5 + $0x78] sm:$0xff]
    %v636 = vld [vmem:[#allocation5 + $0x80] sm:$0xff]
    %v637 = vld [vmem:[#allocation5 + $0x88] sm:$0xf]
    %v638 = vld [vmem:[#allocation5 + $0x8c] sm:$0xff]
    %v639 = vld [vmem:[#allocation5 + $0x94] sm:$0xff]
    %v640 = vld [vmem:[#allocation5 + $0x9c] sm:$0xf]
    %v641 = vld [vmem:[#allocation5 + $0xa0] sm:$0xff]
    %v642 = vld [vmem:[#allocation5 + $0xa8] sm:$0xff]
    %v643 = vld [vmem:[#allocation5 + $0xb0] sm:$0xf]
    %v644 = vld [vmem:[#allocation5 + $0xb4] sm:$0xff]
    %v645 = vld [vmem:[#allocation5 + $0xbc] sm:$0xff]
    %v646 = vld [vmem:[#allocation5 + $0xc4] sm:$0xf]
    %v647 = vld [vmem:[#allocation5 + $0xc8] sm:$0xff]
    %v648 = vld [vmem:[#allocation5 + $0xd0] sm:$0xff]
    %v649 = vld [vmem:[#allocation5 + $0xd8] sm:$0xf]
    %v650 = vld [vmem:[#allocation5 + $0xdc] sm:$0xff]
    %v651 = vld [vmem:[#allocation5 + $0xe4] sm:$0xff]
    %v652 = vld [vmem:[#allocation5 + $0xec] sm:$0xf]
    %v653 = vld [vmem:[#allocation5 + $0xf0] sm:$0xff]
    %v654 = vld [vmem:[#allocation5 + $0xf8] sm:$0xff]
    %v655 = vld [vmem:[#allocation5 + $0x100] sm:$0xf]
    %v656 = vld [vmem:[#allocation5 + $0x104] sm:$0xff]
    %v657 = vld [vmem:[#allocation5 + $0x10c] sm:$0xff]
    %v658 = vld [vmem:[#allocation5 + $0x114] sm:$0xf]
    %v659 = vld [vmem:[#allocation5 + $0x118] sm:$0xff]
    %v660 = vld [vmem:[#allocation5 + $0x120] sm:$0xff]
    %v661 = vld [vmem:[#allocation5 + $0x128] sm:$0xf]
    %v662 = vld [vmem:[#allocation5 + $0x12c] sm:$0xff]
    %v663 = vld [vmem:[#allocation5 + $0x134] sm:$0xff]
    %v664 = vld [vmem:[#allocation5 + $0x13c] sm:$0xf]
    %v665 = vld [vmem:[#allocation5 + $0x140] sm:$0xff]
    %v666 = vld [vmem:[#allocation5 + $0x148] sm:$0xff]
    %v667 = vld [vmem:[#allocation5 + $0x150] sm:$0xf]
    %v668 = vld [vmem:[#allocation5 + $0x154] sm:$0xff]
    %v669 = vld [vmem:[#allocation5 + $0x15c] sm:$0xff]
    %v670 = vld [vmem:[#allocation5 + $0x164] sm:$0xf]
    %v671 = vld [vmem:[#allocation5 + $0x168] sm:$0xff]
    %v672 = vld [vmem:[#allocation5 + $0x170] sm:$0xff]
    %v673 = vld [vmem:[#allocation5 + $0x178] sm:$0xf]
    %v674 = vld [vmem:[#allocation5 + $0x17c] sm:$0xff]
    %v675 = vld [vmem:[#allocation5 + $0x184] sm:$0xff]
    %v676 = vld [vmem:[#allocation5 + $0x18c] sm:$0xf]
    %v677 = vld [vmem:[#allocation5 + $0x190] sm:$0xff]
    %v678 = vld [vmem:[#allocation5 + $0x198] sm:$0xff]
    %v679 = vld [vmem:[#allocation5 + $0x1a0] sm:$0xf]
    %v680 = vld [vmem:[#allocation5 + $0x1a4] sm:$0xff]
    %v681 = vld [vmem:[#allocation5 + $0x1ac] sm:$0xff]
    %v682 = vld [vmem:[#allocation5 + $0x1b4] sm:$0xf]
    %v683 = vld [vmem:[#allocation5 + $0x1b8] sm:$0xff]
    %v684 = vld [vmem:[#allocation5 + $0x1c0] sm:$0xff]
    %v685 = vld [vmem:[#allocation5 + $0x1c8] sm:$0xf]
    %v686 = vld [vmem:[#allocation5 + $0x1cc] sm:$0xff]
    %v687 = vld [vmem:[#allocation5 + $0x1d4] sm:$0xff]
    %v688 = vld [vmem:[#allocation5 + $0x1dc] sm:$0xf]
    %v689 = vld [vmem:[#allocation5 + $0x1e0] sm:$0xff]
    %v690 = vld [vmem:[#allocation5 + $0x1e8] sm:$0xff]
    %v691 = vld [vmem:[#allocation5 + $0x1f0] sm:$0xf]
    %v692 = vld [vmem:[#allocation5 + $0x1f4] sm:$0xff]
    %v693 = vld [vmem:[#allocation5 + $0x1fc] sm:$0xff]
    %v694 = vld [vmem:[#allocation5 + $0x204] sm:$0xf]
    %v695 = vld [vmem:[#allocation5 + $0x208] sm:$0xff]
    %v696 = vld [vmem:[#allocation5 + $0x210] sm:$0xff]
    %v697 = vld [vmem:[#allocation5 + $0x218] sm:$0xf]
    %v698 = vld [vmem:[#allocation5 + $0x21c] sm:$0xff]
    %v699 = vld [vmem:[#allocation5 + $0x224] sm:$0xff]
    %v700 = vld [vmem:[#allocation5 + $0x22c] sm:$0xf]
    %v701 = vld [vmem:[#allocation5 + $0x230] sm:$0xff]
    %v702 = vld [vmem:[#allocation5 + $0x238] sm:$0xff]
    %v703 = vld [vmem:[#allocation5 + $0x240] sm:$0xf]
    %v704 = vld [vmem:[#allocation5 + $0x244] sm:$0xff]
    %v705 = vld [vmem:[#allocation5 + $0x24c] sm:$0xff]
    %v706 = vld [vmem:[#allocation5 + $0x254] sm:$0xf]
    %v707 = vld [vmem:[#allocation5 + $0x258] sm:$0xff]
    %v708 = vld [vmem:[#allocation5 + $0x260] sm:$0xff]
    %v709 = vld [vmem:[#allocation5 + $0x268] sm:$0xf]
    %v710 = vld [vmem:[#allocation5 + $0x26c] sm:$0xff]
    %v711 = vld [vmem:[#allocation5 + $0x274] sm:$0xff]
    %v712 = vld [vmem:[#allocation5 + $0x27c] sm:$0xf]
    %v713 = vld [vmem:[#allocation5 + $0x280] sm:$0xff]
    %v714 = vld [vmem:[#allocation5 + $0x288] sm:$0xff]
    %v715 = vld [vmem:[#allocation5 + $0x290] sm:$0xf]
    %v716 = vld [vmem:[#allocation5 + $0x294] sm:$0xff]
    %v717 = vld [vmem:[#allocation5 + $0x29c] sm:$0xff]
    %v718 = vld [vmem:[#allocation5 + $0x2a4] sm:$0xf]
    %v719 = vld [vmem:[#allocation5 + $0x2a8] sm:$0xff]
    %v720 = vld [vmem:[#allocation5 + $0x2b0] sm:$0xff]
    %v721 = vld [vmem:[#allocation5 + $0x2b8] sm:$0xf]
    %v722 = vld [vmem:[#allocation5 + $0x2bc] sm:$0xff]
    %v723 = vld [vmem:[#allocation5 + $0x2c4] sm:$0xff]
    %v724 = vld [vmem:[#allocation5 + $0x2cc] sm:$0xf]
    %v725 = vld [vmem:[#allocation5 + $0x2d0] sm:$0xff]
    %v726 = vld [vmem:[#allocation5 + $0x2d8] sm:$0xff]
    %v727 = vld [vmem:[#allocation5 + $0x2e0] sm:$0xf]
    %v728 = vld [vmem:[#allocation5 + $0x2e4] sm:$0xff]
    %v729 = vld [vmem:[#allocation5 + $0x2ec] sm:$0xff]
    %v730 = vld [vmem:[#allocation5 + $0x2f4] sm:$0xf]
    %v731 = vld [vmem:[#allocation5 + $0x2f8] sm:$0xff]
    %v732 = vld [vmem:[#allocation5 + $0x300] sm:$0xff]
    %v733 = vld [vmem:[#allocation5 + $0x308] sm:$0xf]
    %v734 = vld [vmem:[#allocation5 + $0x30c] sm:$0xff]
    %v735 = vld [vmem:[#allocation5 + $0x314] sm:$0xff]
    %v736 = vld [vmem:[#allocation5 + $0x31c] sm:$0xf]
    %v737 = vld [vmem:[#allocation5 + $0x320] sm:$0xff]
    %v738 = vld [vmem:[#allocation5 + $0x328] sm:$0xff]
    %v739 = vld [vmem:[#allocation5 + $0x330] sm:$0xf]
    %v740 = vld [vmem:[#allocation5 + $0x334] sm:$0xff]
    %v741 = vld [vmem:[#allocation5 + $0x33c] sm:$0xff]
    %v742 = vld [vmem:[#allocation5 + $0x344] sm:$0xf]
    %v743 = vld [vmem:[#allocation5 + $0x348] sm:$0xff]
    %v744 = vld [vmem:[#allocation5 + $0x350] sm:$0xff]
    %v745 = vld [vmem:[#allocation5 + $0x358] sm:$0xf]
    %v746 = vld [vmem:[#allocation5 + $0x35c] sm:$0xff]
    %v747 = vld [vmem:[#allocation5 + $0x364] sm:$0xff]
    %v748 = vld [vmem:[#allocation5 + $0x36c] sm:$0xf]
    %v749 = vld [vmem:[#allocation5 + $0x370] sm:$0xff]
    %v750 = vld [vmem:[#allocation5 + $0x378] sm:$0xff]
    %v751 = vld [vmem:[#allocation5 + $0x380] sm:$0xf]
    %v752 = vld [vmem:[#allocation5 + $0x384] sm:$0xff]
    %v753 = vld [vmem:[#allocation5 + $0x38c] sm:$0xff]
    %v754 = vld [vmem:[#allocation5 + $0x394] sm:$0xf]
    %v755 = vld [vmem:[#allocation5 + $0x398] sm:$0xff]
    %v756 = vld [vmem:[#allocation5 + $0x3a0] sm:$0xff]
    %v757 = vld [vmem:[#allocation5 + $0x3a8] sm:$0xf]
    %v758 = vld [vmem:[#allocation5 + $0x3ac] sm:$0xff]
    %v759 = vld [vmem:[#allocation5 + $0x3b4] sm:$0xff]
    %v760 = vld [vmem:[#allocation5 + $0x3bc] sm:$0xf]
    %v761 = vld [vmem:[#allocation5 + $0x3c0] sm:$0xff]
    %v762 = vld [vmem:[#allocation5 + $0x3c8] sm:$0xff]
    %v763 = vld [vmem:[#allocation5 + $0x3d0] sm:$0xf]
    %v764 = vld [vmem:[#allocation5 + $0x3d4] sm:$0xff]
    %v765 = vld [vmem:[#allocation5 + $0x3dc] sm:$0xff]
    %v766 = vld [vmem:[#allocation5 + $0x3e4] sm:$0xf]
    %v767 = vld [vmem:[#allocation5 + $0x3e8] sm:$0xff]
    %v768 = vld [vmem:[#allocation5 + $0x3f0] sm:$0xff]
    %v769 = vld [vmem:[#allocation5 + $0x3f8] sm:$0xf]
    %v770 = vld [vmem:[#allocation5 + $0x3fc] sm:$0xff]
    %v771 = vld [vmem:[#allocation5 + $0x404] sm:$0xff]
    %v772 = vld [vmem:[#allocation5 + $0x40c] sm:$0xf]
    %v773 = vld [vmem:[#allocation5 + $0x410] sm:$0xff]
    %v774 = vld [vmem:[#allocation5 + $0x418] sm:$0xff]
    %v775 = vld [vmem:[#allocation5 + $0x420] sm:$0xf]
    %v776 = vld [vmem:[#allocation5 + $0x424] sm:$0xff]
    %v777 = vld [vmem:[#allocation5 + $0x42c] sm:$0xff]
    %v778 = vld [vmem:[#allocation5 + $0x434] sm:$0xf]
    %v779 = vld [vmem:[#allocation5 + $0x438] sm:$0xff]
    %v780 = vld [vmem:[#allocation5 + $0x440] sm:$0xff]
    %v781 = vld [vmem:[#allocation5 + $0x448] sm:$0xf]
    %v782 = vld [vmem:[#allocation5 + $0x44c] sm:$0xff]
    %v783 = vld [vmem:[#allocation5 + $0x454] sm:$0xff]
    %v784 = vld [vmem:[#allocation5 + $0x45c] sm:$0xf]
    %v785 = vld [vmem:[#allocation5 + $0x460] sm:$0xff]
    %v786 = vld [vmem:[#allocation5 + $0x468] sm:$0xff]
    %v787 = vld [vmem:[#allocation5 + $0x470] sm:$0xf]
    %v788 = vld [vmem:[#allocation5 + $0x474] sm:$0xff]
    %v789 = vld [vmem:[#allocation5 + $0x47c] sm:$0xff]
    %v790 = vld [vmem:[#allocation5 + $0x484] sm:$0xf]
    %v791 = vld [vmem:[#allocation5 + $0x488] sm:$0xff]
    %v792 = vld [vmem:[#allocation5 + $0x490] sm:$0xff]
    %v793 = vld [vmem:[#allocation5 + $0x498] sm:$0xf]
    %v794 = vld [vmem:[#allocation5 + $0x49c] sm:$0xff]
    %v795 = vld [vmem:[#allocation5 + $0x4a4] sm:$0xff]
    %v796 = vld [vmem:[#allocation5 + $0x4ac] sm:$0xf]
    %v797 = vld [vmem:[#allocation5 + $0x4b0] sm:$0xff]
    %v798 = vld [vmem:[#allocation5 + $0x4b8] sm:$0xff]
    %v799 = vld [vmem:[#allocation5 + $0x4c0] sm:$0xf]
    %v800 = vld [vmem:[#allocation5 + $0x4c4] sm:$0xff]
    %v801 = vld [vmem:[#allocation5 + $0x4cc] sm:$0xff]
    %v802 = vld [vmem:[#allocation5 + $0x4d4] sm:$0xf]
    %v803 = vld [vmem:[#allocation5 + $0x4d8] sm:$0xff]
    %v804 = vld [vmem:[#allocation5 + $0x4e0] sm:$0xff]
    %v805 = vld [vmem:[#allocation5 + $0x4e8] sm:$0xf]
    %v806 = vld [vmem:[#allocation5 + $0x4ec] sm:$0xff]
    %v807 = vld [vmem:[#allocation5 + $0x4f4] sm:$0xff]
    %v808 = vld [vmem:[#allocation5 + $0x4fc] sm:$0xf]
    %v809 = vld [vmem:[%s4] sm:$0x1f]
    %v811 = vlaneseq
    %v812 = vshrl.u32 %v811, 7
    %v813 = vsub.s32 0, %v812
    %v814 = vrot.slane %v809, %v813
    %v815 = vlaneseq
    %v816 = vshrl.u32 %v815, 7
    %v817 = vsub.s32 1, %v816
    %v818 = vrot.slane %v809, %v817
    %v819 = vlaneseq
    %v820 = vshrl.u32 %v819, 7
    %v821 = vsub.s32 2, %v820
    %v822 = vrot.slane %v809, %v821
    %v823 = vlaneseq
    %v824 = vshrl.u32 %v823, 7
    %v825 = vsub.s32 3, %v824
    %v826 = vrot.slane %v809, %v825
    %v827 = vlaneseq
    %v828 = vshrl.u32 %v827, 7
    %v829 = vsub.s32 4, %v828
    %v830 = vrot.slane %v809, %v829
    %v1028 = vunpack.c.l.b16 %v617
    %v1029 = vunpack.c.h.b16 %v617
    %v1030 = vunpack.c.l.b16 %v618
    %v1031 = vunpack.c.h.b16 %v618
    %v1032 = vunpack.c.l.b16 %v619
    %v1033 = vunpack.c.l.b16 %v620
    %v1034 = vunpack.c.h.b16 %v620
    %v1035 = vunpack.c.l.b16 %v621
    %v1036 = vunpack.c.h.b16 %v621
    %v1037 = vunpack.c.l.b16 %v622
    %v1038 = vunpack.c.l.b16 %v623
    %v1039 = vunpack.c.h.b16 %v623
    %v1040 = vunpack.c.l.b16 %v624
    %v1041 = vunpack.c.h.b16 %v624
    %v1042 = vunpack.c.l.b16 %v625
    %v1043 = vunpack.c.l.b16 %v626
    %v1044 = vunpack.c.h.b16 %v626
    %v1045 = vunpack.c.l.b16 %v627
    %v1046 = vunpack.c.h.b16 %v627
    %v1047 = vunpack.c.l.b16 %v628
    %v1048 = vunpack.c.l.b16 %v629
    %v1049 = vunpack.c.h.b16 %v629
    %v1050 = vunpack.c.l.b16 %v630
    %v1051 = vunpack.c.h.b16 %v630
    %v1052 = vunpack.c.l.b16 %v631
    %v1053 = vunpack.c.l.b16 %v632
    %v1054 = vunpack.c.h.b16 %v632
    %v1055 = vunpack.c.l.b16 %v633
    %v1056 = vunpack.c.h.b16 %v633
    %v1057 = vunpack.c.l.b16 %v634
    %v1058 = vunpack.c.l.b16 %v635
    %v1059 = vunpack.c.h.b16 %v635
    %v1060 = vunpack.c.l.b16 %v636
    %v1061 = vunpack.c.h.b16 %v636
    %v1062 = vunpack.c.l.b16 %v637
    %v1063 = vunpack.c.l.b16 %v638
    %v1064 = vunpack.c.h.b16 %v638
    %v1065 = vunpack.c.l.b16 %v639
    %v1066 = vunpack.c.h.b16 %v639
    %v1067 = vunpack.c.l.b16 %v640
    %v1068 = vunpack.c.l.b16 %v641
    %v1069 = vunpack.c.h.b16 %v641
    %v1070 = vunpack.c.l.b16 %v642
    %v1071 = vunpack.c.h.b16 %v642
    %v1072 = vunpack.c.l.b16 %v643
    %v1073 = vunpack.c.l.b16 %v644
    %v1074 = vunpack.c.h.b16 %v644
    %v1075 = vunpack.c.l.b16 %v645
    %v1076 = vunpack.c.h.b16 %v645
    %v1077 = vunpack.c.l.b16 %v646
    %v1078 = vunpack.c.l.b16 %v647
    %v1079 = vunpack.c.h.b16 %v647
    %v1080 = vunpack.c.l.b16 %v648
    %v1081 = vunpack.c.h.b16 %v648
    %v1082 = vunpack.c.l.b16 %v649
    %v1083 = vunpack.c.l.b16 %v650
    %v1084 = vunpack.c.h.b16 %v650
    %v1085 = vunpack.c.l.b16 %v651
    %v1086 = vunpack.c.h.b16 %v651
    %v1087 = vunpack.c.l.b16 %v652
    %v1088 = vunpack.c.l.b16 %v653
    %v1089 = vunpack.c.h.b16 %v653
    %v1090 = vunpack.c.l.b16 %v654
    %v1091 = vunpack.c.h.b16 %v654
    %v1092 = vunpack.c.l.b16 %v655
    %v1093 = vunpack.c.l.b16 %v656
    %v1094 = vunpack.c.h.b16 %v656
    %v1095 = vunpack.c.l.b16 %v657
    %v1096 = vunpack.c.h.b16 %v657
    %v1097 = vunpack.c.l.b16 %v658
    %v1098 = vunpack.c.l.b16 %v659
    %v1099 = vunpack.c.h.b16 %v659
    %v1100 = vunpack.c.l.b16 %v660
    %v1101 = vunpack.c.h.b16 %v660
    %v1102 = vunpack.c.l.b16 %v661
    %v1103 = vunpack.c.l.b16 %v662
    %v1104 = vunpack.c.h.b16 %v662
    %v1105 = vunpack.c.l.b16 %v663
    %v1106 = vunpack.c.h.b16 %v663
    %v1107 = vunpack.c.l.b16 %v664
    %v1108 = vunpack.c.l.b16 %v665
    %v1109 = vunpack.c.h.b16 %v665
    %v1110 = vunpack.c.l.b16 %v666
    %v1111 = vunpack.c.h.b16 %v666
    %v1112 = vunpack.c.l.b16 %v667
    %v1113 = vunpack.c.l.b16 %v668
    %v1114 = vunpack.c.h.b16 %v668
    %v1115 = vunpack.c.l.b16 %v669
    %v1116 = vunpack.c.h.b16 %v669
    %v1117 = vunpack.c.l.b16 %v670
    %v1118 = vunpack.c.l.b16 %v671
    %v1119 = vunpack.c.h.b16 %v671
    %v1120 = vunpack.c.l.b16 %v672
    %v1121 = vunpack.c.h.b16 %v672
    %v1122 = vunpack.c.l.b16 %v673
    %v1123 = vunpack.c.l.b16 %v674
    %v1124 = vunpack.c.h.b16 %v674
    %v1125 = vunpack.c.l.b16 %v675
    %v1126 = vunpack.c.h.b16 %v675
    %v1127 = vunpack.c.l.b16 %v676
    %v1128 = vunpack.c.l.b16 %v677
    %v1129 = vunpack.c.h.b16 %v677
    %v1130 = vunpack.c.l.b16 %v678
    %v1131 = vunpack.c.h.b16 %v678
    %v1132 = vunpack.c.l.b16 %v679
    %v1133 = vunpack.c.l.b16 %v680
    %v1134 = vunpack.c.h.b16 %v680
    %v1135 = vunpack.c.l.b16 %v681
    %v1136 = vunpack.c.h.b16 %v681
    %v1137 = vunpack.c.l.b16 %v682
    %v1138 = vunpack.c.l.b16 %v683
    %v1139 = vunpack.c.h.b16 %v683
    %v1140 = vunpack.c.l.b16 %v684
    %v1141 = vunpack.c.h.b16 %v684
    %v1142 = vunpack.c.l.b16 %v685
    %v1143 = vunpack.c.l.b16 %v686
    %v1144 = vunpack.c.h.b16 %v686
    %v1145 = vunpack.c.l.b16 %v687
    %v1146 = vunpack.c.h.b16 %v687
    %v1147 = vunpack.c.l.b16 %v688
    %v1148 = vunpack.c.l.b16 %v689
    %v1149 = vunpack.c.h.b16 %v689
    %v1150 = vunpack.c.l.b16 %v690
    %v1151 = vunpack.c.h.b16 %v690
    %v1152 = vunpack.c.l.b16 %v691
    %v1153 = vunpack.c.l.b16 %v692
    %v1154 = vunpack.c.h.b16 %v692
    %v1155 = vunpack.c.l.b16 %v693
    %v1156 = vunpack.c.h.b16 %v693
    %v1157 = vunpack.c.l.b16 %v694
    %v1158 = vunpack.c.l.b16 %v695
    %v1159 = vunpack.c.h.b16 %v695
    %v1160 = vunpack.c.l.b16 %v696
    %v1161 = vunpack.c.h.b16 %v696
    %v1162 = vunpack.c.l.b16 %v697
    %v1163 = vunpack.c.l.b16 %v698
    %v1164 = vunpack.c.h.b16 %v698
    %v1165 = vunpack.c.l.b16 %v699
    %v1166 = vunpack.c.h.b16 %v699
    %v1167 = vunpack.c.l.b16 %v700
    %v1168 = vunpack.c.l.b16 %v701
    %v1169 = vunpack.c.h.b16 %v701
    %v1170 = vunpack.c.l.b16 %v702
    %v1171 = vunpack.c.h.b16 %v702
    %v1172 = vunpack.c.l.b16 %v703
    %v1173 = vunpack.c.l.b16 %v704
    %v1174 = vunpack.c.h.b16 %v704
    %v1175 = vunpack.c.l.b16 %v705
    %v1176 = vunpack.c.h.b16 %v705
    %v1177 = vunpack.c.l.b16 %v706
    %v1178 = vunpack.c.l.b16 %v707
    %v1179 = vunpack.c.h.b16 %v707
    %v1180 = vunpack.c.l.b16 %v708
    %v1181 = vunpack.c.h.b16 %v708
    %v1182 = vunpack.c.l.b16 %v709
    %v1183 = vunpack.c.l.b16 %v710
    %v1184 = vunpack.c.h.b16 %v710
    %v1185 = vunpack.c.l.b16 %v711
    %v1186 = vunpack.c.h.b16 %v711
    %v1187 = vunpack.c.l.b16 %v712
    %v1188 = vunpack.c.l.b16 %v713
    %v1189 = vunpack.c.h.b16 %v713
    %v1190 = vunpack.c.l.b16 %v714
    %v1191 = vunpack.c.h.b16 %v714
    %v1192 = vunpack.c.l.b16 %v715
    %v1193 = vunpack.c.l.b16 %v716
    %v1194 = vunpack.c.h.b16 %v716
    %v1195 = vunpack.c.l.b16 %v717
    %v1196 = vunpack.c.h.b16 %v717
    %v1197 = vunpack.c.l.b16 %v718
    %v1198 = vunpack.c.l.b16 %v719
    %v1199 = vunpack.c.h.b16 %v719
    %v1200 = vunpack.c.l.b16 %v720
    %v1201 = vunpack.c.h.b16 %v720
    %v1202 = vunpack.c.l.b16 %v721
    %v1203 = vunpack.c.l.b16 %v722
    %v1204 = vunpack.c.h.b16 %v722
    %v1205 = vunpack.c.l.b16 %v723
    %v1206 = vunpack.c.h.b16 %v723
    %v1207 = vunpack.c.l.b16 %v724
    %v1208 = vunpack.c.l.b16 %v725
    %v1209 = vunpack.c.h.b16 %v725
    %v1210 = vunpack.c.l.b16 %v726
    %v1211 = vunpack.c.h.b16 %v726
    %v1212 = vunpack.c.l.b16 %v727
    %v1213 = vunpack.c.l.b16 %v728
    %v1214 = vunpack.c.h.b16 %v728
    %v1215 = vunpack.c.l.b16 %v729
    %v1216 = vunpack.c.h.b16 %v729
    %v1217 = vunpack.c.l.b16 %v730
    %v1218 = vunpack.c.l.b16 %v731
    %v1219 = vunpack.c.h.b16 %v731
    %v1220 = vunpack.c.l.b16 %v732
    %v1221 = vunpack.c.h.b16 %v732
    %v1222 = vunpack.c.l.b16 %v733
    %v1223 = vunpack.c.l.b16 %v734
    %v1224 = vunpack.c.h.b16 %v734
    %v1225 = vunpack.c.l.b16 %v735
    %v1226 = vunpack.c.h.b16 %v735
    %v1227 = vunpack.c.l.b16 %v736
    %v1228 = vunpack.c.l.b16 %v737
    %v1229 = vunpack.c.h.b16 %v737
    %v1230 = vunpack.c.l.b16 %v738
    %v1231 = vunpack.c.h.b16 %v738
    %v1232 = vunpack.c.l.b16 %v739
    %v1233 = vunpack.c.l.b16 %v740
    %v1234 = vunpack.c.h.b16 %v740
    %v1235 = vunpack.c.l.b16 %v741
    %v1236 = vunpack.c.h.b16 %v741
    %v1237 = vunpack.c.l.b16 %v742
    %v1238 = vunpack.c.l.b16 %v743
    %v1239 = vunpack.c.h.b16 %v743
    %v1240 = vunpack.c.l.b16 %v744
    %v1241 = vunpack.c.h.b16 %v744
    %v1242 = vunpack.c.l.b16 %v745
    %v1243 = vunpack.c.l.b16 %v746
    %v1244 = vunpack.c.h.b16 %v746
    %v1245 = vunpack.c.l.b16 %v747
    %v1246 = vunpack.c.h.b16 %v747
    %v1247 = vunpack.c.l.b16 %v748
    %v1248 = vunpack.c.l.b16 %v749
    %v1249 = vunpack.c.h.b16 %v749
    %v1250 = vunpack.c.l.b16 %v750
    %v1251 = vunpack.c.h.b16 %v750
    %v1252 = vunpack.c.l.b16 %v751
    %v1253 = vunpack.c.l.b16 %v752
    %v1254 = vunpack.c.h.b16 %v752
    %v1255 = vunpack.c.l.b16 %v753
    %v1256 = vunpack.c.h.b16 %v753
    %v1257 = vunpack.c.l.b16 %v754
    %v1258 = vunpack.c.l.b16 %v755
    %v1259 = vunpack.c.h.b16 %v755
    %v1260 = vunpack.c.l.b16 %v756
    %v1261 = vunpack.c.h.b16 %v756
    %v1262 = vunpack.c.l.b16 %v757
    %v1263 = vunpack.c.l.b16 %v758
    %v1264 = vunpack.c.h.b16 %v758
    %v1265 = vunpack.c.l.b16 %v759
    %v1266 = vunpack.c.h.b16 %v759
    %v1267 = vunpack.c.l.b16 %v760
    %v1268 = vunpack.c.l.b16 %v761
    %v1269 = vunpack.c.h.b16 %v761
    %v1270 = vunpack.c.l.b16 %v762
    %v1271 = vunpack.c.h.b16 %v762
    %v1272 = vunpack.c.l.b16 %v763
    %v1273 = vunpack.c.l.b16 %v764
    %v1274 = vunpack.c.h.b16 %v764
    %v1275 = vunpack.c.l.b16 %v765
    %v1276 = vunpack.c.h.b16 %v765
    %v1277 = vunpack.c.l.b16 %v766
    %v1278 = vunpack.c.l.b16 %v767
    %v1279 = vunpack.c.h.b16 %v767
    %v1280 = vunpack.c.l.b16 %v768
    %v1281 = vunpack.c.h.b16 %v768
    %v1282 = vunpack.c.l.b16 %v769
    %v1283 = vunpack.c.l.b16 %v770
    %v1284 = vunpack.c.h.b16 %v770
    %v1285 = vunpack.c.l.b16 %v771
    %v1286 = vunpack.c.h.b16 %v771
    %v1287 = vunpack.c.l.b16 %v772
    %v1288 = vunpack.c.l.b16 %v773
    %v1289 = vunpack.c.h.b16 %v773
    %v1290 = vunpack.c.l.b16 %v774
    %v1291 = vunpack.c.h.b16 %v774
    %v1292 = vunpack.c.l.b16 %v775
    %v1293 = vunpack.c.l.b16 %v776
    %v1294 = vunpack.c.h.b16 %v776
    %v1295 = vunpack.c.l.b16 %v777
    %v1296 = vunpack.c.h.b16 %v777
    %v1297 = vunpack.c.l.b16 %v778
    %v1298 = vunpack.c.l.b16 %v779
    %v1299 = vunpack.c.h.b16 %v779
    %v1300 = vunpack.c.l.b16 %v780
    %v1301 = vunpack.c.h.b16 %v780
    %v1302 = vunpack.c.l.b16 %v781
    %v1303 = vunpack.c.l.b16 %v782
    %v1304 = vunpack.c.h.b16 %v782
    %v1305 = vunpack.c.l.b16 %v783
    %v1306 = vunpack.c.h.b16 %v783
    %v1307 = vunpack.c.l.b16 %v784
    %v1308 = vunpack.c.l.b16 %v785
    %v1309 = vunpack.c.h.b16 %v785
    %v1310 = vunpack.c.l.b16 %v786
    %v1311 = vunpack.c.h.b16 %v786
    %v1312 = vunpack.c.l.b16 %v787
    %v1313 = vunpack.c.l.b16 %v788
    %v1314 = vunpack.c.h.b16 %v788
    %v1315 = vunpack.c.l.b16 %v789
    %v1316 = vunpack.c.h.b16 %v789
    %v1317 = vunpack.c.l.b16 %v790
    %v1318 = vunpack.c.l.b16 %v791
    %v1319 = vunpack.c.h.b16 %v791
    %v1320 = vunpack.c.l.b16 %v792
    %v1321 = vunpack.c.h.b16 %v792
    %v1322 = vunpack.c.l.b16 %v793
    %v1323 = vunpack.c.l.b16 %v794
    %v1324 = vunpack.c.h.b16 %v794
    %v1325 = vunpack.c.l.b16 %v795
    %v1326 = vunpack.c.h.b16 %v795
    %v1327 = vunpack.c.l.b16 %v796
    %v1328 = vunpack.c.l.b16 %v797
    %v1329 = vunpack.c.h.b16 %v797
    %v1330 = vunpack.c.l.b16 %v798
    %v1331 = vunpack.c.h.b16 %v798
    %v1332 = vunpack.c.l.b16 %v799
    %v1333 = vunpack.c.l.b16 %v800
    %v1334 = vunpack.c.h.b16 %v800
    %v1335 = vunpack.c.l.b16 %v801
    %v1336 = vunpack.c.h.b16 %v801
    %v1337 = vunpack.c.l.b16 %v802
    %v1338 = vunpack.c.l.b16 %v803
    %v1339 = vunpack.c.h.b16 %v803
    %v1340 = vunpack.c.l.b16 %v804
    %v1341 = vunpack.c.h.b16 %v804
    %v1342 = vunpack.c.l.b16 %v805
    %v1343 = vunpack.c.l.b16 %v806
    %v1344 = vunpack.c.h.b16 %v806
    %v1345 = vunpack.c.l.b16 %v807
    %v1346 = vunpack.c.h.b16 %v807
    %v1347 = vunpack.c.l.b16 %v808
    %v1348 = vpack.c.b16 %v1033, %v1028
    %v1349 = vpack.c.b16 %v1034, %v1029
    %v1350 = vpack.c.b16 %v1035, %v1030
    %v1351 = vpack.c.b16 %v1036, %v1031
    %v1352 = vpack.c.b16 %v1037, %v1032
    %v1353 = vpack.c.b16 %v1043, %v1038
    %v1354 = vpack.c.b16 %v1044, %v1039
    %v1355 = vpack.c.b16 %v1045, %v1040
    %v1356 = vpack.c.b16 %v1046, %v1041
    %v1357 = vpack.c.b16 %v1047, %v1042
    %v1358 = vpack.c.b16 %v1053, %v1048
    %v1359 = vpack.c.b16 %v1054, %v1049
    %v1360 = vpack.c.b16 %v1055, %v1050
    %v1361 = vpack.c.b16 %v1056, %v1051
    %v1362 = vpack.c.b16 %v1057, %v1052
    %v1363 = vpack.c.b16 %v1063, %v1058
    %v1364 = vpack.c.b16 %v1064, %v1059
    %v1365 = vpack.c.b16 %v1065, %v1060
    %v1366 = vpack.c.b16 %v1066, %v1061
    %v1367 = vpack.c.b16 %v1067, %v1062
    %v1368 = vpack.c.b16 %v1073, %v1068
    %v1369 = vpack.c.b16 %v1074, %v1069
    %v1370 = vpack.c.b16 %v1075, %v1070
    %v1371 = vpack.c.b16 %v1076, %v1071
    %v1372 = vpack.c.b16 %v1077, %v1072
    %v1373 = vpack.c.b16 %v1083, %v1078
    %v1374 = vpack.c.b16 %v1084, %v1079
    %v1375 = vpack.c.b16 %v1085, %v1080
    %v1376 = vpack.c.b16 %v1086, %v1081
    %v1377 = vpack.c.b16 %v1087, %v1082
    %v1378 = vpack.c.b16 %v1093, %v1088
    %v1379 = vpack.c.b16 %v1094, %v1089
    %v1380 = vpack.c.b16 %v1095, %v1090
    %v1381 = vpack.c.b16 %v1096, %v1091
    %v1382 = vpack.c.b16 %v1097, %v1092
    %v1383 = vpack.c.b16 %v1103, %v1098
    %v1384 = vpack.c.b16 %v1104, %v1099
    %v1385 = vpack.c.b16 %v1105, %v1100
    %v1386 = vpack.c.b16 %v1106, %v1101
    %v1387 = vpack.c.b16 %v1107, %v1102
    %v1388 = vpack.c.b16 %v1113, %v1108
    %v1389 = vpack.c.b16 %v1114, %v1109
    %v1390 = vpack.c.b16 %v1115, %v1110
    %v1391 = vpack.c.b16 %v1116, %v1111
    %v1392 = vpack.c.b16 %v1117, %v1112
    %v1393 = vpack.c.b16 %v1123, %v1118
    %v1394 = vpack.c.b16 %v1124, %v1119
    %v1395 = vpack.c.b16 %v1125, %v1120
    %v1396 = vpack.c.b16 %v1126, %v1121
    %v1397 = vpack.c.b16 %v1127, %v1122
    %v1398 = vpack.c.b16 %v1133, %v1128
    %v1399 = vpack.c.b16 %v1134, %v1129
    %v1400 = vpack.c.b16 %v1135, %v1130
    %v1401 = vpack.c.b16 %v1136, %v1131
    %v1402 = vpack.c.b16 %v1137, %v1132
    %v1403 = vpack.c.b16 %v1143, %v1138
    %v1404 = vpack.c.b16 %v1144, %v1139
    %v1405 = vpack.c.b16 %v1145, %v1140
    %v1406 = vpack.c.b16 %v1146, %v1141
    %v1407 = vpack.c.b16 %v1147, %v1142
    %v1408 = vpack.c.b16 %v1153, %v1148
    %v1409 = vpack.c.b16 %v1154, %v1149
    %v1410 = vpack.c.b16 %v1155, %v1150
    %v1411 = vpack.c.b16 %v1156, %v1151
    %v1412 = vpack.c.b16 %v1157, %v1152
    %v1413 = vpack.c.b16 %v1163, %v1158
    %v1414 = vpack.c.b16 %v1164, %v1159
    %v1415 = vpack.c.b16 %v1165, %v1160
    %v1416 = vpack.c.b16 %v1166, %v1161
    %v1417 = vpack.c.b16 %v1167, %v1162
    %v1418 = vpack.c.b16 %v1173, %v1168
    %v1419 = vpack.c.b16 %v1174, %v1169
    %v1420 = vpack.c.b16 %v1175, %v1170
    %v1421 = vpack.c.b16 %v1176, %v1171
    %v1422 = vpack.c.b16 %v1177, %v1172
    %v1423 = vpack.c.b16 %v1183, %v1178
    %v1424 = vpack.c.b16 %v1184, %v1179
    %v1425 = vpack.c.b16 %v1185, %v1180
    %v1426 = vpack.c.b16 %v1186, %v1181
    %v1427 = vpack.c.b16 %v1187, %v1182
    %v1428 = vpack.c.b16 %v1193, %v1188
    %v1429 = vpack.c.b16 %v1194, %v1189
    %v1430 = vpack.c.b16 %v1195, %v1190
    %v1431 = vpack.c.b16 %v1196, %v1191
    %v1432 = vpack.c.b16 %v1197, %v1192
    %v1433 = vpack.c.b16 %v1203, %v1198
    %v1434 = vpack.c.b16 %v1204, %v1199
    %v1435 = vpack.c.b16 %v1205, %v1200
    %v1436 = vpack.c.b16 %v1206, %v1201
    %v1437 = vpack.c.b16 %v1207, %v1202
    %v1438 = vpack.c.b16 %v1213, %v1208
    %v1439 = vpack.c.b16 %v1214, %v1209
    %v1440 = vpack.c.b16 %v1215, %v1210
    %v1441 = vpack.c.b16 %v1216, %v1211
    %v1442 = vpack.c.b16 %v1217, %v1212
    %v1443 = vpack.c.b16 %v1223, %v1218
    %v1444 = vpack.c.b16 %v1224, %v1219
    %v1445 = vpack.c.b16 %v1225, %v1220
    %v1446 = vpack.c.b16 %v1226, %v1221
    %v1447 = vpack.c.b16 %v1227, %v1222
    %v1448 = vpack.c.b16 %v1233, %v1228
    %v1449 = vpack.c.b16 %v1234, %v1229
    %v1450 = vpack.c.b16 %v1235, %v1230
    %v1451 = vpack.c.b16 %v1236, %v1231
    %v1452 = vpack.c.b16 %v1237, %v1232
    %v1453 = vpack.c.b16 %v1243, %v1238
    %v1454 = vpack.c.b16 %v1244, %v1239
    %v1455 = vpack.c.b16 %v1245, %v1240
    %v1456 = vpack.c.b16 %v1246, %v1241
    %v1457 = vpack.c.b16 %v1247, %v1242
    %v1458 = vpack.c.b16 %v1253, %v1248
    %v1459 = vpack.c.b16 %v1254, %v1249
    %v1460 = vpack.c.b16 %v1255, %v1250
    %v1461 = vpack.c.b16 %v1256, %v1251
    %v1462 = vpack.c.b16 %v1257, %v1252
    %v1463 = vpack.c.b16 %v1263, %v1258
    %v1464 = vpack.c.b16 %v1264, %v1259
    %v1465 = vpack.c.b16 %v1265, %v1260
    %v1466 = vpack.c.b16 %v1266, %v1261
    %v1467 = vpack.c.b16 %v1267, %v1262
    %v1468 = vpack.c.b16 %v1273, %v1268
    %v1469 = vpack.c.b16 %v1274, %v1269
    %v1470 = vpack.c.b16 %v1275, %v1270
    %v1471 = vpack.c.b16 %v1276, %v1271
    %v1472 = vpack.c.b16 %v1277, %v1272
    %v1473 = vpack.c.b16 %v1283, %v1278
    %v1474 = vpack.c.b16 %v1284, %v1279
    %v1475 = vpack.c.b16 %v1285, %v1280
    %v1476 = vpack.c.b16 %v1286, %v1281
    %v1477 = vpack.c.b16 %v1287, %v1282
    %v1478 = vpack.c.b16 %v1293, %v1288
    %v1479 = vpack.c.b16 %v1294, %v1289
    %v1480 = vpack.c.b16 %v1295, %v1290
    %v1481 = vpack.c.b16 %v1296, %v1291
    %v1482 = vpack.c.b16 %v1297, %v1292
    %v1483 = vpack.c.b16 %v1303, %v1298
    %v1484 = vpack.c.b16 %v1304, %v1299
    %v1485 = vpack.c.b16 %v1305, %v1300
    %v1486 = vpack.c.b16 %v1306, %v1301
    %v1487 = vpack.c.b16 %v1307, %v1302
    %v1488 = vpack.c.b16 %v1313, %v1308
    %v1489 = vpack.c.b16 %v1314, %v1309
    %v1490 = vpack.c.b16 %v1315, %v1310
    %v1491 = vpack.c.b16 %v1316, %v1311
    %v1492 = vpack.c.b16 %v1317, %v1312
    %v1493 = vpack.c.b16 %v1323, %v1318
    %v1494 = vpack.c.b16 %v1324, %v1319
    %v1495 = vpack.c.b16 %v1325, %v1320
    %v1496 = vpack.c.b16 %v1326, %v1321
    %v1497 = vpack.c.b16 %v1327, %v1322
    %v1498 = vpack.c.b16 %v1333, %v1328
    %v1499 = vpack.c.b16 %v1334, %v1329
    %v1500 = vpack.c.b16 %v1335, %v1330
    %v1501 = vpack.c.b16 %v1336, %v1331
    %v1502 = vpack.c.b16 %v1337, %v1332
    %v1503 = vpack.c.b16 %v1343, %v1338
    %v1504 = vpack.c.b16 %v1344, %v1339
    %v1505 = vpack.c.b16 %v1345, %v1340
    %v1506 = vpack.c.b16 %v1346, %v1341
    %v1507 = vpack.c.b16 %v1347, %v1342
    %1668 = vmatprep.subr.bf16.mxu0 %v1349
    %1669 = vmatpush1.bf16.msra.mxu0 %v1348
    %1670 = vmatprep.subr.bf16.mxu0 %v1354
    %1671 = vmatpush1.bf16.msra.mxu0 %v1353
    %1672 = vmatprep.subr.bf16.mxu0 %v1359
    %1673 = vmatpush1.bf16.msra.mxu0 %v1358
    %1674 = vmatprep.subr.bf16.mxu0 %v1364
    %1675 = vmatpush1.bf16.msra.mxu0 %v1363
    %1676 = vmatprep.subr.bf16.mxu0 %v1369
    %1677 = vmatpush1.bf16.msra.mxu0 %v1368
    %1678 = vmatprep.subr.bf16.mxu0 %v1374
    %1679 = vmatpush1.bf16.msra.mxu0 %v1373
    %1680 = vmatprep.subr.bf16.mxu0 %v1379
    %1681 = vmatpush1.bf16.msra.mxu0 %v1378
    %1682 = vmatprep.subr.bf16.mxu0 %v1384
    %1683 = vmatpush1.bf16.msra.mxu0 %v1383
    %1684 = vmatprep.subr.bf16.mxu0 %v1389
    %1685 = vmatpush1.bf16.msra.mxu0 %v1388
    %1686 = vmatprep.subr.bf16.mxu0 %v1394
    %1687 = vmatpush1.bf16.msra.mxu0 %v1393
    %1688 = vmatprep.subr.bf16.mxu0 %v1399
    %1689 = vmatpush1.bf16.msra.mxu0 %v1398
    %1690 = vmatprep.subr.bf16.mxu0 %v1404
    %1691 = vmatpush1.bf16.msra.mxu0 %v1403
    %1692 = vmatprep.subr.bf16.mxu0 %v1409
    %1693 = vmatpush1.bf16.msra.mxu0 %v1408
    %1694 = vmatprep.subr.bf16.mxu0 %v1414
    %1695 = vmatpush1.bf16.msra.mxu0 %v1413
    %1696 = vmatprep.subr.bf16.mxu0 %v1419
    %1697 = vmatpush1.bf16.msra.mxu0 %v1418
    %1698 = vmatprep.subr.bf16.mxu0 %v1424
    %1699 = vmatpush1.bf16.msra.mxu0 %v1423
    %1700 = vmatprep.mubr.bf16.mxu0 %v614
    %1701 = vmatmul.mubr.bf16.gmra.mrb[0].mxu0 %v613
    %v1702 = vpop.f32.mrb[0].mxu0
    %v1703 = vadd.f32 %v814, %v1702
    %v1704 = vpop.f32.mrb[0].mxu0
    %v1705 = vadd.f32 %v818, %v1704
    %v1706 = vpop.f32.mrb[0].mxu0
    %v1707 = vpop.f32.mrb[0].mxu0
    %1708 = vdwg.mxu0
    %1709 = vmatprep.subr.bf16.mxu0 %v1429
    %1710 = vmatpush1.bf16.msra.mxu0 %v1428
    %1711 = vmatprep.subr.bf16.mxu0 %v1434
    %1712 = vmatpush1.bf16.msra.mxu0 %v1433
    %1713 = vmatprep.subr.bf16.mxu0 %v1439
    %1714 = vmatpush1.bf16.msra.mxu0 %v1438
    %1715 = vmatprep.subr.bf16.mxu0 %v1444
    %1716 = vmatpush1.bf16.msra.mxu0 %v1443
    %1717 = vmatprep.subr.bf16.mxu0 %v1449
    %1718 = vmatpush1.bf16.msra.mxu0 %v1448
    %1719 = vmatprep.subr.bf16.mxu0 %v1454
    %1720 = vmatpush1.bf16.msra.mxu0 %v1453
    %1721 = vmatprep.subr.bf16.mxu0 %v1459
    %1722 = vmatpush1.bf16.msra.mxu0 %v1458
    %1723 = vmatprep.subr.bf16.mxu0 %v1464
    %1724 = vmatpush1.bf16.msra.mxu0 %v1463
    %1725 = vmatprep.subr.bf16.mxu0 %v1469
    %1726 = vmatpush1.bf16.msra.mxu0 %v1468
    %1727 = vmatprep.subr.bf16.mxu0 %v1474
    %1728 = vmatpush1.bf16.msra.mxu0 %v1473
    %1729 = vmatprep.subr.bf16.mxu0 %v1479
    %1730 = vmatpush1.bf16.msra.mxu0 %v1478
    %1731 = vmatprep.subr.bf16.mxu0 %v1484
    %1732 = vmatpush1.bf16.msra.mxu0 %v1483
    %1733 = vmatprep.subr.bf16.mxu0 %v1489
    %1734 = vmatpush1.bf16.msra.mxu0 %v1488
    %1735 = vmatprep.subr.bf16.mxu0 %v1494
    %1736 = vmatpush1.bf16.msra.mxu0 %v1493
    %1737 = vmatprep.subr.bf16.mxu0 %v1499
    %1738 = vmatpush1.bf16.msra.mxu0 %v1498
    %1739 = vmatprep.subr.bf16.mxu0 %v1504
    %1740 = vmatpush1.bf16.msra.mxu0 %v1503
    %1741 = vmatprep.mubr.bf16.mxu0 %v616
    %1742 = vmatmul.mubr.bf16.gmra.mrb[0].mxu0 %v615
    %v1743 = vpop.f32.mrb[0].mxu0
    %v1744 = vadd.f32 %v1703, %v1743
    %v1745 = vpop.f32.mrb[0].mxu0
    %v1746 = vadd.f32 %v1705, %v1745
    %v1747 = vpop.f32.mrb[0].mxu0
    %v1748 = vpop.f32.mrb[0].mxu0
    %1749 = vdwg.mxu0
    %1750 = vmatprep.subr.bf16.mxu0 %v1351
    %1751 = vmatpush1.bf16.msra.mxu0 %v1350
    %1752 = vmatprep.subr.bf16.mxu0 %v1356
    %1753 = vmatpush1.bf16.msra.mxu0 %v1355
    %1754 = vmatprep.subr.bf16.mxu0 %v1361
    %1755 = vmatpush1.bf16.msra.mxu0 %v1360
    %1756 = vmatprep.subr.bf16.mxu0 %v1366
    %1757 = vmatpush1.bf16.msra.mxu0 %v1365
    %1758 = vmatprep.subr.bf16.mxu0 %v1371
    %1759 = vmatpush1.bf16.msra.mxu0 %v1370
    %1760 = vmatprep.subr.bf16.mxu0 %v1376
    %1761 = vmatpush1.bf16.msra.mxu0 %v1375
    %1762 = vmatprep.subr.bf16.mxu0 %v1381
    %1763 = vmatpush1.bf16.msra.mxu0 %v1380
    %1764 = vmatprep.subr.bf16.mxu0 %v1386
    %1765 = vmatpush1.bf16.msra.mxu0 %v1385
    %1766 = vmatprep.subr.bf16.mxu0 %v1391
    %1767 = vmatpush1.bf16.msra.mxu0 %v1390
    %1768 = vmatprep.subr.bf16.mxu0 %v1396
    %1769 = vmatpush1.bf16.msra.mxu0 %v1395
    %1770 = vmatprep.subr.bf16.mxu0 %v1401
    %1771 = vmatpush1.bf16.msra.mxu0 %v1400
    %1772 = vmatprep.subr.bf16.mxu0 %v1406
    %1773 = vmatpush1.bf16.msra.mxu0 %v1405
    %1774 = vmatprep.subr.bf16.mxu0 %v1411
    %1775 = vmatpush1.bf16.msra.mxu0 %v1410
    %1776 = vmatprep.subr.bf16.mxu0 %v1416
    %1777 = vmatpush1.bf16.msra.mxu0 %v1415
    %1778 = vmatprep.subr.bf16.mxu0 %v1421
    %1779 = vmatpush1.bf16.msra.mxu0 %v1420
    %1780 = vmatprep.subr.bf16.mxu0 %v1426
    %1781 = vmatpush1.bf16.msra.mxu0 %v1425
    %1782 = vmatprep.mubr.bf16.mxu0 %v614
    %1783 = vmatmul.mubr.bf16.gmra.mrb[0].mxu0 %v613
    %v1784 = vpop.f32.mrb[0].mxu0
    %v1785 = vadd.f32 %v822, %v1784
    %v1786 = vpop.f32.mrb[0].mxu0
    %v1787 = vadd.f32 %v826, %v1786
    %v1788 = vpop.f32.mrb[0].mxu0
    %v1789 = vpop.f32.mrb[0].mxu0
    %1790 = vdwg.mxu0
    %1791 = vmatprep.subr.bf16.mxu0 %v1431
    %1792 = vmatpush1.bf16.msra.mxu0 %v1430
    %1793 = vmatprep.subr.bf16.mxu0 %v1436
    %1794 = vmatpush1.bf16.msra.mxu0 %v1435
    %1795 = vmatprep.subr.bf16.mxu0 %v1441
    %1796 = vmatpush1.bf16.msra.mxu0 %v1440
    %1797 = vmatprep.subr.bf16.mxu0 %v1446
    %1798 = vmatpush1.bf16.msra.mxu0 %v1445
    %1799 = vmatprep.subr.bf16.mxu0 %v1451
    %1800 = vmatpush1.bf16.msra.mxu0 %v1450
    %1801 = vmatprep.subr.bf16.mxu0 %v1456
    %1802 = vmatpush1.bf16.msra.mxu0 %v1455
    %1803 = vmatprep.subr.bf16.mxu0 %v1461
    %1804 = vmatpush1.bf16.msra.mxu0 %v1460
    %1805 = vmatprep.subr.bf16.mxu0 %v1466
    %1806 = vmatpush1.bf16.msra.mxu0 %v1465
    %1807 = vmatprep.subr.bf16.mxu0 %v1471
    %1808 = vmatpush1.bf16.msra.mxu0 %v1470
    %1809 = vmatprep.subr.bf16.mxu0 %v1476
    %1810 = vmatpush1.bf16.msra.mxu0 %v1475
    %1811 = vmatprep.subr.bf16.mxu0 %v1481
    %1812 = vmatpush1.bf16.msra.mxu0 %v1480
    %1813 = vmatprep.subr.bf16.mxu0 %v1486
    %1814 = vmatpush1.bf16.msra.mxu0 %v1485
    %1815 = vmatprep.subr.bf16.mxu0 %v1491
    %1816 = vmatpush1.bf16.msra.mxu0 %v1490
    %1817 = vmatprep.subr.bf16.mxu0 %v1496
    %1818 = vmatpush1.bf16.msra.mxu0 %v1495
    %1819 = vmatprep.subr.bf16.mxu0 %v1501
    %1820 = vmatpush1.bf16.msra.mxu0 %v1500
    %1821 = vmatprep.subr.bf16.mxu0 %v1506
    %1822 = vmatpush1.bf16.msra.mxu0 %v1505
    %1823 = vmatprep.mubr.bf16.mxu0 %v616
    %1824 = vmatmul.mubr.bf16.gmra.mrb[0].mxu0 %v615
    %v1825 = vpop.f32.mrb[0].mxu0
    %v1826 = vadd.f32 %v1785, %v1825
    %v1827 = vpop.f32.mrb[0].mxu0
    %v1828 = vadd.f32 %v1787, %v1827
    %v1829 = vpop.f32.mrb[0].mxu0
    %v1830 = vpop.f32.mrb[0].mxu0
    %1831 = vdwg.mxu0
    %1832 = vmatprep.subr.bf16.mxu0 0
    %1833 = vmatpush1.bf16.msra.mxu0 %v1352
    %1834 = vmatprep.subr.bf16.mxu0 0
    %1835 = vmatpush1.bf16.msra.mxu0 %v1357
    %1836 = vmatprep.subr.bf16.mxu0 0
    %1837 = vmatpush1.bf16.msra.mxu0 %v1362
    %1838 = vmatprep.subr.bf16.mxu0 0
    %1839 = vmatpush1.bf16.msra.mxu0 %v1367
    %1840 = vmatprep.subr.bf16.mxu0 0
    %1841 = vmatpush1.bf16.msra.mxu0 %v1372
    %1842 = vmatprep.subr.bf16.mxu0 0
    %1843 = vmatpush1.bf16.msra.mxu0 %v1377
    %1844 = vmatprep.subr.bf16.mxu0 0
    %1845 = vmatpush1.bf16.msra.mxu0 %v1382
    %1846 = vmatprep.subr.bf16.mxu0 0
    %1847 = vmatpush1.bf16.msra.mxu0 %v1387
    %1848 = vmatprep.subr.bf16.mxu0 0
    %1849 = vmatpush1.bf16.msra.mxu0 %v1392
    %1850 = vmatprep.subr.bf16.mxu0 0
    %1851 = vmatpush1.bf16.msra.mxu0 %v1397
    %1852 = vmatprep.subr.bf16.mxu0 0
    %1853 = vmatpush1.bf16.msra.mxu0 %v1402
    %1854 = vmatprep.subr.bf16.mxu0 0
    %1855 = vmatpush1.bf16.msra.mxu0 %v1407
    %1856 = vmatprep.subr.bf16.mxu0 0
    %1857 = vmatpush1.bf16.msra.mxu0 %v1412
    %1858 = vmatprep.subr.bf16.mxu0 0
    %1859 = vmatpush1.bf16.msra.mxu0 %v1417
    %1860 = vmatprep.subr.bf16.mxu0 0
    %1861 = vmatpush1.bf16.msra.mxu0 %v1422
    %1862 = vmatprep.subr.bf16.mxu0 0
    %1863 = vmatpush1.bf16.msra.mxu0 %v1427
    %1864 = vmatprep.mubr.bf16.mxu0 %v614
    %1865 = vmatmul.mubr.bf16.gmra.mrb[0].mxu0 %v613
    %v1866 = vpop.f32.mrb[0].mxu0
    %v1867 = vadd.f32 %v830, %v1866
    %v1868 = vpop.f32.mrb[0].mxu0
    %v1869 = vpop.f32.mrb[0].mxu0
    %v1870 = vpop.f32.mrb[0].mxu0
    %1871 = vdwg.mxu0
    %1872 = vmatprep.subr.bf16.mxu0 0
    %1873 = vmatpush1.bf16.msra.mxu0 %v1432
    %1874 = vmatprep.subr.bf16.mxu0 0
    %1875 = vmatpush1.bf16.msra.mxu0 %v1437
    %1876 = vmatprep.subr.bf16.mxu0 0
    %1877 = vmatpush1.bf16.msra.mxu0 %v1442
    %1878 = vmatprep.subr.bf16.mxu0 0
    %1879 = vmatpush1.bf16.msra.mxu0 %v1447
    %1880 = vmatprep.subr.bf16.mxu0 0
    %1881 = vmatpush1.bf16.msra.mxu0 %v1452
    %1882 = vmatprep.subr.bf16.mxu0 0
    %1883 = vmatpush1.bf16.msra.mxu0 %v1457
    %1884 = vmatprep.subr.bf16.mxu0 0
    %1885 = vmatpush1.bf16.msra.mxu0 %v1462
    %1886 = vmatprep.subr.bf16.mxu0 0
    %1887 = vmatpush1.bf16.msra.mxu0 %v1467
    %1888 = vmatprep.subr.bf16.mxu0 0
    %1889 = vmatpush1.bf16.msra.mxu0 %v1472
    %1890 = vmatprep.subr.bf16.mxu0 0
    %1891 = vmatpush1.bf16.msra.mxu0 %v1477
    %1892 = vmatprep.subr.bf16.mxu0 0
    %1893 = vmatpush1.bf16.msra.mxu0 %v1482
    %1894 = vmatprep.subr.bf16.mxu0 0
    %1895 = vmatpush1.bf16.msra.mxu0 %v1487
    %1896 = vmatprep.subr.bf16.mxu0 0
    %1897 = vmatpush1.bf16.msra.mxu0 %v1492
    %1898 = vmatprep.subr.bf16.mxu0 0
    %1899 = vmatpush1.bf16.msra.mxu0 %v1497
    %1900 = vmatprep.subr.bf16.mxu0 0
    %1901 = vmatpush1.bf16.msra.mxu0 %v1502
    %1902 = vmatprep.subr.bf16.mxu0 0
    %1903 = vmatpush1.bf16.msra.mxu0 %v1507
    %1904 = vmatprep.mubr.bf16.mxu0 %v616
    %1905 = vmatmul.mubr.bf16.gmra.mrb[0].mxu0 %v615
    %v1906 = vpop.f32.mrb[0].mxu0
    %v1907 = vadd.f32 %v1867, %v1906
    %v1908 = vpop.f32.mrb[0].mxu0
    %v1909 = vpop.f32.mrb[0].mxu0
    %v1910 = vpop.f32.mrb[0].mxu0
    %1911 = vdwg.mxu0
    %v1912 = vmax.f32 %v1744, 0.0
    %v1913 = vmax.f32 %v1746, 0.0
    %v1914 = vmax.f32 %v1826, 0.0
    %v1915 = vmax.f32 %v1828, 0.0
    %v1916 = vmax.f32 %v1907, 0.0
    %v1917 = vpack.c.bf16 %v1912, %v1912
    %v1918 = vpack.c.bf16 %v1913, %v1913
    %v1919 = vpack.c.bf16 %v1914, %v1914
    %v1920 = vpack.c.bf16 %v1915, %v1915
    %v1921 = vpack.c.bf16 %v1916, %v1916
    %v1922 = vld [vmem:[#allocation7] sm:$0xff]
    %v1923 = vld [vmem:[#allocation7 + $0x8] sm:$0xff]
    %v1924 = vld [vmem:[#allocation7 + $0x10] sm:$0xff]
    %v1925 = vld [vmem:[#allocation7 + $0x18] sm:$0xff]
    %v1926 = vld [vmem:[#allocation7 + $0x20] sm:$0xff]
    %v1927 = vld [vmem:[#allocation7 + $0x28] sm:$0xff]
    %v1928 = vld [vmem:[#allocation7 + $0x30] sm:$0xff]
    %v1929 = vld [vmem:[#allocation7 + $0x38] sm:$0xff]
    %v1930 = vld [vmem:[#allocation7 + $0x40] sm:$0xff]
    %v1931 = vld [vmem:[#allocation7 + $0x48] sm:$0xff]
    %v1932 = vld [vmem:[#allocation7 + $0x50] sm:$0xff]
    %v1933 = vld [vmem:[#allocation7 + $0x58] sm:$0xff]
    %v1934 = vld [vmem:[#allocation7 + $0x60] sm:$0xff]
    %v1935 = vld [vmem:[#allocation7 + $0x68] sm:$0xff]
    %v1936 = vld [vmem:[#allocation7 + $0x70] sm:$0xff]
    %v1937 = vld [vmem:[#allocation7 + $0x78] sm:$0xff]
    %v1938 = vld [vmem:[#allocation7 + $0x80] sm:$0xff]
    %v1939 = vld [vmem:[#allocation7 + $0x88] sm:$0xff]
    %v1940 = vld [vmem:[#allocation7 + $0x90] sm:$0xff]
    %v1941 = vld [vmem:[#allocation7 + $0x98] sm:$0xff]
    %v1942 = vld [vmem:[#allocation7 + $0xa0] sm:$0xff]
    %v1943 = vld [vmem:[#allocation7 + $0xa8] sm:$0xff]
    %v1944 = vld [vmem:[#allocation7 + $0xb0] sm:$0xff]
    %v1945 = vld [vmem:[#allocation7 + $0xb8] sm:$0xff]
    %v1946 = vld [vmem:[#allocation7 + $0xc0] sm:$0xff]
    %v1947 = vld [vmem:[#allocation7 + $0xc8] sm:$0xff]
    %v1948 = vld [vmem:[#allocation7 + $0xd0] sm:$0xff]
    %v1949 = vld [vmem:[#allocation7 + $0xd8] sm:$0xff]
    %v1950 = vld [vmem:[#allocation7 + $0xe0] sm:$0xff]
    %v1951 = vld [vmem:[#allocation7 + $0xe8] sm:$0xff]
    %v1952 = vld [vmem:[#allocation7 + $0xf0] sm:$0xff]
    %v1953 = vld [vmem:[#allocation7 + $0xf8] sm:$0xff]
    %v1954 = vld [vmem:[#allocation7 + $0x100] sm:$0xff]
    %v1955 = vld [vmem:[#allocation7 + $0x108] sm:$0xff]
    %v1956 = vld [vmem:[#allocation7 + $0x110] sm:$0xff]
    %v1957 = vld [vmem:[#allocation7 + $0x118] sm:$0xff]
    %v1958 = vld [vmem:[#allocation7 + $0x120] sm:$0xff]
    %v1959 = vld [vmem:[#allocation7 + $0x128] sm:$0xff]
    %v1960 = vld [vmem:[#allocation7 + $0x130] sm:$0xff]
    %v1961 = vld [vmem:[#allocation7 + $0x138] sm:$0xff]
    %v1962 = vld [vmem:[#allocation7 + $0x140] sm:$0xff]
    %v1963 = vld [vmem:[#allocation7 + $0x148] sm:$0xff]
    %v1964 = vld [vmem:[#allocation7 + $0x150] sm:$0xff]
    %v1965 = vld [vmem:[#allocation7 + $0x158] sm:$0xff]
    %v1966 = vld [vmem:[#allocation7 + $0x160] sm:$0xff]
    %v1967 = vld [vmem:[#allocation7 + $0x168] sm:$0xff]
    %v1968 = vld [vmem:[#allocation7 + $0x170] sm:$0xff]
    %v1969 = vld [vmem:[#allocation7 + $0x178] sm:$0xff]
    %v1970 = vld [vmem:[#allocation7 + $0x180] sm:$0xff]
    %v1971 = vld [vmem:[#allocation7 + $0x188] sm:$0xff]
    %v1972 = vld [vmem:[#allocation7 + $0x190] sm:$0xff]
    %v1973 = vld [vmem:[#allocation7 + $0x198] sm:$0xff]
    %v1974 = vld [vmem:[#allocation7 + $0x1a0] sm:$0xff]
    %v1975 = vld [vmem:[#allocation7 + $0x1a8] sm:$0xff]
    %v1976 = vld [vmem:[#allocation7 + $0x1b0] sm:$0xff]
    %v1977 = vld [vmem:[#allocation7 + $0x1b8] sm:$0xff]
    %v1978 = vld [vmem:[#allocation7 + $0x1c0] sm:$0xff]
    %v1979 = vld [vmem:[#allocation7 + $0x1c8] sm:$0xff]
    %v1980 = vld [vmem:[#allocation7 + $0x1d0] sm:$0xff]
    %v1981 = vld [vmem:[#allocation7 + $0x1d8] sm:$0xff]
    %v1982 = vld [vmem:[#allocation7 + $0x1e0] sm:$0xff]
    %v1983 = vld [vmem:[#allocation7 + $0x1e8] sm:$0xff]
    %v1984 = vld [vmem:[#allocation7 + $0x1f0] sm:$0xff]
    %v1985 = vld [vmem:[#allocation7 + $0x1f8] sm:$0xff]
    %v1986 = vld [vmem:[#allocation7 + $0x200] sm:$0xff]
    %v1987 = vld [vmem:[#allocation7 + $0x208] sm:$0xff]
    %v1988 = vld [vmem:[#allocation7 + $0x210] sm:$0xff]
    %v1989 = vld [vmem:[#allocation7 + $0x218] sm:$0xff]
    %v1990 = vld [vmem:[#allocation7 + $0x220] sm:$0xff]
    %v1991 = vld [vmem:[#allocation7 + $0x228] sm:$0xff]
    %v1992 = vld [vmem:[#allocation7 + $0x230] sm:$0xff]
    %v1993 = vld [vmem:[#allocation7 + $0x238] sm:$0xff]
    %v1994 = vld [vmem:[#allocation7 + $0x240] sm:$0xff]
    %v1995 = vld [vmem:[#allocation7 + $0x248] sm:$0xff]
    %v1996 = vld [vmem:[#allocation7 + $0x250] sm:$0xff]
    %v1997 = vld [vmem:[#allocation7 + $0x258] sm:$0xff]
    %v1998 = vld [vmem:[#allocation7 + $0x260] sm:$0xff]
    %v1999 = vld [vmem:[#allocation7 + $0x268] sm:$0xff]
    %v2000 = vld [vmem:[#allocation7 + $0x270] sm:$0xff]
    %v2001 = vld [vmem:[#allocation7 + $0x278] sm:$0xff]
    %v2002 = vld [vmem:[%s6] sm:$0x3]
    %v2004 = vlaneseq
    %v2005 = vshrl.u32 %v2004, 7
    %v2006 = vsub.s32 0, %v2005
    %v2007 = vrot.slane %v2002, %v2006
    %v2008 = vlaneseq
    %v2009 = vshrl.u32 %v2008, 7
    %v2010 = vsub.s32 1, %v2009
    %v2011 = vrot.slane %v2002, %v2010
    %v2094 = vunpack.c.l.b16 %v1922
    %v2095 = vunpack.c.h.b16 %v1922
    %v2096 = vunpack.c.l.b16 %v1923
    %v2097 = vunpack.c.h.b16 %v1923
    %v2098 = vunpack.c.l.b16 %v1924
    %v2099 = vunpack.c.h.b16 %v1924
    %v2100 = vunpack.c.l.b16 %v1925
    %v2101 = vunpack.c.h.b16 %v1925
    %v2102 = vunpack.c.l.b16 %v1926
    %v2103 = vunpack.c.h.b16 %v1926
    %v2104 = vunpack.c.l.b16 %v1927
    %v2105 = vunpack.c.h.b16 %v1927
    %v2106 = vunpack.c.l.b16 %v1928
    %v2107 = vunpack.c.h.b16 %v1928
    %v2108 = vunpack.c.l.b16 %v1929
    %v2109 = vunpack.c.h.b16 %v1929
    %v2110 = vunpack.c.l.b16 %v1930
    %v2111 = vunpack.c.h.b16 %v1930
    %v2112 = vunpack.c.l.b16 %v1931
    %v2113 = vunpack.c.h.b16 %v1931
    %v2114 = vunpack.c.l.b16 %v1932
    %v2115 = vunpack.c.h.b16 %v1932
    %v2116 = vunpack.c.l.b16 %v1933
    %v2117 = vunpack.c.h.b16 %v1933
    %v2118 = vunpack.c.l.b16 %v1934
    %v2119 = vunpack.c.h.b16 %v1934
    %v2120 = vunpack.c.l.b16 %v1935
    %v2121 = vunpack.c.h.b16 %v1935
    %v2122 = vunpack.c.l.b16 %v1936
    %v2123 = vunpack.c.h.b16 %v1936
    %v2124 = vunpack.c.l.b16 %v1937
    %v2125 = vunpack.c.h.b16 %v1937
    %v2126 = vunpack.c.l.b16 %v1938
    %v2127 = vunpack.c.h.b16 %v1938
    %v2128 = vunpack.c.l.b16 %v1939
    %v2129 = vunpack.c.h.b16 %v1939
    %v2130 = vunpack.c.l.b16 %v1940
    %v2131 = vunpack.c.h.b16 %v1940
    %v2132 = vunpack.c.l.b16 %v1941
    %v2133 = vunpack.c.h.b16 %v1941
    %v2134 = vunpack.c.l.b16 %v1942
    %v2135 = vunpack.c.h.b16 %v1942
    %v2136 = vunpack.c.l.b16 %v1943
    %v2137 = vunpack.c.h.b16 %v1943
    %v2138 = vunpack.c.l.b16 %v1944
    %v2139 = vunpack.c.h.b16 %v1944
    %v2140 = vunpack.c.l.b16 %v1945
    %v2141 = vunpack.c.h.b16 %v1945
    %v2142 = vunpack.c.l.b16 %v1946
    %v2143 = vunpack.c.h.b16 %v1946
    %v2144 = vunpack.c.l.b16 %v1947
    %v2145 = vunpack.c.h.b16 %v1947
    %v2146 = vunpack.c.l.b16 %v1948
    %v2147 = vunpack.c.h.b16 %v1948
    %v2148 = vunpack.c.l.b16 %v1949
    %v2149 = vunpack.c.h.b16 %v1949
    %v2150 = vunpack.c.l.b16 %v1950
    %v2151 = vunpack.c.h.b16 %v1950
    %v2152 = vunpack.c.l.b16 %v1951
    %v2153 = vunpack.c.h.b16 %v1951
    %v2154 = vunpack.c.l.b16 %v1952
    %v2155 = vunpack.c.h.b16 %v1952
    %v2156 = vunpack.c.l.b16 %v1953
    %v2157 = vunpack.c.h.b16 %v1953
    %v2158 = vunpack.c.l.b16 %v1954
    %v2159 = vunpack.c.h.b16 %v1954
    %v2160 = vunpack.c.l.b16 %v1955
    %v2161 = vunpack.c.h.b16 %v1955
    %v2162 = vunpack.c.l.b16 %v1956
    %v2163 = vunpack.c.h.b16 %v1956
    %v2164 = vunpack.c.l.b16 %v1957
    %v2165 = vunpack.c.h.b16 %v1957
    %v2166 = vunpack.c.l.b16 %v1958
    %v2167 = vunpack.c.h.b16 %v1958
    %v2168 = vunpack.c.l.b16 %v1959
    %v2169 = vunpack.c.h.b16 %v1959
    %v2170 = vunpack.c.l.b16 %v1960
    %v2171 = vunpack.c.h.b16 %v1960
    %v2172 = vunpack.c.l.b16 %v1961
    %v2173 = vunpack.c.h.b16 %v1961
    %v2174 = vunpack.c.l.b16 %v1962
    %v2175 = vunpack.c.h.b16 %v1962
    %v2176 = vunpack.c.l.b16 %v1963
    %v2177 = vunpack.c.h.b16 %v1963
    %v2178 = vunpack.c.l.b16 %v1964
    %v2179 = vunpack.c.h.b16 %v1964
    %v2180 = vunpack.c.l.b16 %v1965
    %v2181 = vunpack.c.h.b16 %v1965
    %v2182 = vunpack.c.l.b16 %v1966
    %v2183 = vunpack.c.h.b16 %v1966
    %v2184 = vunpack.c.l.b16 %v1967
    %v2185 = vunpack.c.h.b16 %v1967
    %v2186 = vunpack.c.l.b16 %v1968
    %v2187 = vunpack.c.h.b16 %v1968
    %v2188 = vunpack.c.l.b16 %v1969
    %v2189 = vunpack.c.h.b16 %v1969
    %v2190 = vunpack.c.l.b16 %v1970
    %v2191 = vunpack.c.h.b16 %v1970
    %v2192 = vunpack.c.l.b16 %v1971
    %v2193 = vunpack.c.h.b16 %v1971
    %v2194 = vunpack.c.l.b16 %v1972
    %v2195 = vunpack.c.h.b16 %v1972
    %v2196 = vunpack.c.l.b16 %v1973
    %v2197 = vunpack.c.h.b16 %v1973
    %v2198 = vunpack.c.l.b16 %v1974
    %v2199 = vunpack.c.h.b16 %v1974
    %v2200 = vunpack.c.l.b16 %v1975
    %v2201 = vunpack.c.h.b16 %v1975
    %v2202 = vunpack.c.l.b16 %v1976
    %v2203 = vunpack.c.h.b16 %v1976
    %v2204 = vunpack.c.l.b16 %v1977
    %v2205 = vunpack.c.h.b16 %v1977
    %v2206 = vunpack.c.l.b16 %v1978
    %v2207 = vunpack.c.h.b16 %v1978
    %v2208 = vunpack.c.l.b16 %v1979
    %v2209 = vunpack.c.h.b16 %v1979
    %v2210 = vunpack.c.l.b16 %v1980
    %v2211 = vunpack.c.h.b16 %v1980
    %v2212 = vunpack.c.l.b16 %v1981
    %v2213 = vunpack.c.h.b16 %v1981
    %v2214 = vunpack.c.l.b16 %v1982
    %v2215 = vunpack.c.h.b16 %v1982
    %v2216 = vunpack.c.l.b16 %v1983
    %v2217 = vunpack.c.h.b16 %v1983
    %v2218 = vunpack.c.l.b16 %v1984
    %v2219 = vunpack.c.h.b16 %v1984
    %v2220 = vunpack.c.l.b16 %v1985
    %v2221 = vunpack.c.h.b16 %v1985
    %v2222 = vunpack.c.l.b16 %v1986
    %v2223 = vunpack.c.h.b16 %v1986
    %v2224 = vunpack.c.l.b16 %v1987
    %v2225 = vunpack.c.h.b16 %v1987
    %v2226 = vunpack.c.l.b16 %v1988
    %v2227 = vunpack.c.h.b16 %v1988
    %v2228 = vunpack.c.l.b16 %v1989
    %v2229 = vunpack.c.h.b16 %v1989
    %v2230 = vunpack.c.l.b16 %v1990
    %v2231 = vunpack.c.h.b16 %v1990
    %v2232 = vunpack.c.l.b16 %v1991
    %v2233 = vunpack.c.h.b16 %v1991
    %v2234 = vunpack.c.l.b16 %v1992
    %v2235 = vunpack.c.h.b16 %v1992
    %v2236 = vunpack.c.l.b16 %v1993
    %v2237 = vunpack.c.h.b16 %v1993
    %v2238 = vunpack.c.l.b16 %v1994
    %v2239 = vunpack.c.h.b16 %v1994
    %v2240 = vunpack.c.l.b16 %v1995
    %v2241 = vunpack.c.h.b16 %v1995
    %v2242 = vunpack.c.l.b16 %v1996
    %v2243 = vunpack.c.h.b16 %v1996
    %v2244 = vunpack.c.l.b16 %v1997
    %v2245 = vunpack.c.h.b16 %v1997
    %v2246 = vunpack.c.l.b16 %v1998
    %v2247 = vunpack.c.h.b16 %v1998
    %v2248 = vunpack.c.l.b16 %v1999
    %v2249 = vunpack.c.h.b16 %v1999
    %v2250 = vunpack.c.l.b16 %v2000
    %v2251 = vunpack.c.h.b16 %v2000
    %v2252 = vunpack.c.l.b16 %v2001
    %v2253 = vunpack.c.h.b16 %v2001
    %v2254 = vpack.c.b16 %v2096, %v2094
    %v2255 = vpack.c.b16 %v2097, %v2095
    %v2256 = vpack.c.b16 %v2100, %v2098
    %v2257 = vpack.c.b16 %v2101, %v2099
    %v2258 = vpack.c.b16 %v2104, %v2102
    %v2259 = vpack.c.b16 %v2105, %v2103
    %v2260 = vpack.c.b16 %v2108, %v2106
    %v2261 = vpack.c.b16 %v2109, %v2107
    %v2262 = vpack.c.b16 %v2112, %v2110
    %v2263 = vpack.c.b16 %v2113, %v2111
    %v2264 = vpack.c.b16 %v2116, %v2114
    %v2265 = vpack.c.b16 %v2117, %v2115
    %v2266 = vpack.c.b16 %v2120, %v2118
    %v2267 = vpack.c.b16 %v2121, %v2119
    %v2268 = vpack.c.b16 %v2124, %v2122
    %v2269 = vpack.c.b16 %v2125, %v2123
    %v2270 = vpack.c.b16 %v2128, %v2126
    %v2271 = vpack.c.b16 %v2129, %v2127
    %v2272 = vpack.c.b16 %v2132, %v2130
    %v2273 = vpack.c.b16 %v2133, %v2131
    %v2274 = vpack.c.b16 %v2136, %v2134
    %v2275 = vpack.c.b16 %v2137, %v2135
    %v2276 = vpack.c.b16 %v2140, %v2138
    %v2277 = vpack.c.b16 %v2141, %v2139
    %v2278 = vpack.c.b16 %v2144, %v2142
    %v2279 = vpack.c.b16 %v2145, %v2143
    %v2280 = vpack.c.b16 %v2148, %v2146
    %v2281 = vpack.c.b16 %v2149, %v2147
    %v2282 = vpack.c.b16 %v2152, %v2150
    %v2283 = vpack.c.b16 %v2153, %v2151
    %v2284 = vpack.c.b16 %v2156, %v2154
    %v2285 = vpack.c.b16 %v2157, %v2155
    %v2286 = vpack.c.b16 %v2160, %v2158
    %v2287 = vpack.c.b16 %v2161, %v2159
    %v2288 = vpack.c.b16 %v2164, %v2162
    %v2289 = vpack.c.b16 %v2165, %v2163
    %v2290 = vpack.c.b16 %v2168, %v2166
    %v2291 = vpack.c.b16 %v2169, %v2167
    %v2292 = vpack.c.b16 %v2172, %v2170
    %v2293 = vpack.c.b16 %v2173, %v2171
    %v2294 = vpack.c.b16 %v2176, %v2174
    %v2295 = vpack.c.b16 %v2177, %v2175
    %v2296 = vpack.c.b16 %v2180, %v2178
    %v2297 = vpack.c.b16 %v2181, %v2179
    %v2298 = vpack.c.b16 %v2184, %v2182
    %v2299 = vpack.c.b16 %v2185, %v2183
    %v2300 = vpack.c.b16 %v2188, %v2186
    %v2301 = vpack.c.b16 %v2189, %v2187
    %v2302 = vpack.c.b16 %v2192, %v2190
    %v2303 = vpack.c.b16 %v2193, %v2191
    %v2304 = vpack.c.b16 %v2196, %v2194
    %v2305 = vpack.c.b16 %v2197, %v2195
    %v2306 = vpack.c.b16 %v2200, %v2198
    %v2307 = vpack.c.b16 %v2201, %v2199
    %v2308 = vpack.c.b16 %v2204, %v2202
    %v2309 = vpack.c.b16 %v2205, %v2203
    %v2310 = vpack.c.b16 %v2208, %v2206
    %v2311 = vpack.c.b16 %v2209, %v2207
    %v2312 = vpack.c.b16 %v2212, %v2210
    %v2313 = vpack.c.b16 %v2213, %v2211
    %v2314 = vpack.c.b16 %v2216, %v2214
    %v2315 = vpack.c.b16 %v2217, %v2215
    %v2316 = vpack.c.b16 %v2220, %v2218
    %v2317 = vpack.c.b16 %v2221, %v2219
    %v2318 = vpack.c.b16 %v2224, %v2222
    %v2319 = vpack.c.b16 %v2225, %v2223
    %v2320 = vpack.c.b16 %v2228, %v2226
    %v2321 = vpack.c.b16 %v2229, %v2227
    %v2322 = vpack.c.b16 %v2232, %v2230
    %v2323 = vpack.c.b16 %v2233, %v2231
    %v2324 = vpack.c.b16 %v2236, %v2234
    %v2325 = vpack.c.b16 %v2237, %v2235
    %v2326 = vpack.c.b16 %v2240, %v2238
    %v2327 = vpack.c.b16 %v2241, %v2239
    %v2328 = vpack.c.b16 %v2244, %v2242
    %v2329 = vpack.c.b16 %v2245, %v2243
    %v2330 = vpack.c.b16 %v2248, %v2246
    %v2331 = vpack.c.b16 %v2249, %v2247
    %v2332 = vpack.c.b16 %v2252, %v2250
    %v2333 = vpack.c.b16 %v2253, %v2251
    %2414 = vmatprep.subr.bf16.mxu0 %v2255
    %2415 = vmatpush1.bf16.msra.mxu0 %v2254
    %2416 = vmatprep.subr.bf16.mxu0 %v2257
    %2417 = vmatpush1.bf16.msra.mxu0 %v2256
    %2418 = vmatprep.subr.bf16.mxu0 %v2259
    %2419 = vmatpush1.bf16.msra.mxu0 %v2258
    %2420 = vmatprep.subr.bf16.mxu0 %v2261
    %2421 = vmatpush1.bf16.msra.mxu0 %v2260
    %2422 = vmatprep.subr.bf16.mxu0 %v2263
    %2423 = vmatpush1.bf16.msra.mxu0 %v2262
    %2424 = vmatprep.subr.bf16.mxu0 %v2265
    %2425 = vmatpush1.bf16.msra.mxu0 %v2264
    %2426 = vmatprep.subr.bf16.mxu0 %v2267
    %2427 = vmatpush1.bf16.msra.mxu0 %v2266
    %2428 = vmatprep.subr.bf16.mxu0 %v2269
    %2429 = vmatpush1.bf16.msra.mxu0 %v2268
    %2430 = vmatprep.subr.bf16.mxu0 %v2271
    %2431 = vmatpush1.bf16.msra.mxu0 %v2270
    %2432 = vmatprep.subr.bf16.mxu0 %v2273
    %2433 = vmatpush1.bf16.msra.mxu0 %v2272
    %2434 = vmatprep.subr.bf16.mxu0 %v2275
    %2435 = vmatpush1.bf16.msra.mxu0 %v2274
    %2436 = vmatprep.subr.bf16.mxu0 %v2277
    %2437 = vmatpush1.bf16.msra.mxu0 %v2276
    %2438 = vmatprep.subr.bf16.mxu0 %v2279
    %2439 = vmatpush1.bf16.msra.mxu0 %v2278
    %2440 = vmatprep.subr.bf16.mxu0 %v2281
    %2441 = vmatpush1.bf16.msra.mxu0 %v2280
    %2442 = vmatprep.subr.bf16.mxu0 %v2283
    %2443 = vmatpush1.bf16.msra.mxu0 %v2282
    %2444 = vmatprep.subr.bf16.mxu0 %v2285
    %2445 = vmatpush1.bf16.msra.mxu0 %v2284
    %2446 = vmatprep.mubr.bf16.mxu0 %v1918
    %2447 = vmatmul.mubr.bf16.gmra.mrb[0].mxu0 %v1917
    %v2448 = vpop.f32.mrb[0].mxu0
    %v2449 = vadd.f32 %v2007, %v2448
    %v2450 = vpop.f32.mrb[0].mxu0
    %v2451 = vadd.f32 %v2011, %v2450
    %v2452 = vpop.f32.mrb[0].mxu0
    %v2453 = vpop.f32.mrb[0].mxu0
    %2454 = vdwg.mxu0
    %2455 = vmatprep.subr.bf16.mxu0 %v2287
    %2456 = vmatpush1.bf16.msra.mxu0 %v2286
    %2457 = vmatprep.subr.bf16.mxu0 %v2289
    %2458 = vmatpush1.bf16.msra.mxu0 %v2288
    %2459 = vmatprep.subr.bf16.mxu0 %v2291
    %2460 = vmatpush1.bf16.msra.mxu0 %v2290
    %2461 = vmatprep.subr.bf16.mxu0 %v2293
    %2462 = vmatpush1.bf16.msra.mxu0 %v2292
    %2463 = vmatprep.subr.bf16.mxu0 %v2295
    %2464 = vmatpush1.bf16.msra.mxu0 %v2294
    %2465 = vmatprep.subr.bf16.mxu0 %v2297
    %2466 = vmatpush1.bf16.msra.mxu0 %v2296
    %2467 = vmatprep.subr.bf16.mxu0 %v2299
    %2468 = vmatpush1.bf16.msra.mxu0 %v2298
    %2469 = vmatprep.subr.bf16.mxu0 %v2301
    %2470 = vmatpush1.bf16.msra.mxu0 %v2300
    %2471 = vmatprep.subr.bf16.mxu0 %v2303
    %2472 = vmatpush1.bf16.msra.mxu0 %v2302
    %2473 = vmatprep.subr.bf16.mxu0 %v2305
    %2474 = vmatpush1.bf16.msra.mxu0 %v2304
    %2475 = vmatprep.subr.bf16.mxu0 %v2307
    %2476 = vmatpush1.bf16.msra.mxu0 %v2306
    %2477 = vmatprep.subr.bf16.mxu0 %v2309
    %2478 = vmatpush1.bf16.msra.mxu0 %v2308
    %2479 = vmatprep.subr.bf16.mxu0 %v2311
    %2480 = vmatpush1.bf16.msra.mxu0 %v2310
    %2481 = vmatprep.subr.bf16.mxu0 %v2313
    %2482 = vmatpush1.bf16.msra.mxu0 %v2312
    %2483 = vmatprep.subr.bf16.mxu0 %v2315
    %2484 = vmatpush1.bf16.msra.mxu0 %v2314
    %2485 = vmatprep.subr.bf16.mxu0 %v2317
    %2486 = vmatpush1.bf16.msra.mxu0 %v2316
    %2487 = vmatprep.mubr.bf16.mxu0 %v1920
    %2488 = vmatmul.mubr.bf16.gmra.mrb[0].mxu0 %v1919
    %v2489 = vpop.f32.mrb[0].mxu0
    %v2490 = vadd.f32 %v2449, %v2489
    %v2491 = vpop.f32.mrb[0].mxu0
    %v2492 = vadd.f32 %v2451, %v2491
    %v2493 = vpop.f32.mrb[0].mxu0
    %v2494 = vpop.f32.mrb[0].mxu0
    %2495 = vdwg.mxu0
    %2496 = vmatprep.subr.bf16.mxu0 %v2319
    %2497 = vmatpush1.bf16.msra.mxu0 %v2318
    %2498 = vmatprep.subr.bf16.mxu0 %v2321
    %2499 = vmatpush1.bf16.msra.mxu0 %v2320
    %2500 = vmatprep.subr.bf16.mxu0 %v2323
    %2501 = vmatpush1.bf16.msra.mxu0 %v2322
    %2502 = vmatprep.subr.bf16.mxu0 %v2325
    %2503 = vmatpush1.bf16.msra.mxu0 %v2324
    %2504 = vmatprep.subr.bf16.mxu0 %v2327
    %2505 = vmatpush1.bf16.msra.mxu0 %v2326
    %2506 = vmatprep.subr.bf16.mxu0 %v2329
    %2507 = vmatpush1.bf16.msra.mxu0 %v2328
    %2508 = vmatprep.subr.bf16.mxu0 %v2331
    %2509 = vmatpush1.bf16.msra.mxu0 %v2330
    %2510 = vmatprep.subr.bf16.mxu0 %v2333
    %2511 = vmatpush1.bf16.msra.mxu0 %v2332
    %2512 = vmatprep.subr.bf16.mxu0 0
    %2513 = vmatpush1.bf16.msra.mxu0 0
    %2514 = vmatprep.subr.bf16.mxu0 0
    %2515 = vmatpush1.bf16.msra.mxu0 0
    %2516 = vmatprep.subr.bf16.mxu0 0
    %2517 = vmatpush1.bf16.msra.mxu0 0
    %2518 = vmatprep.subr.bf16.mxu0 0
    %2519 = vmatpush1.bf16.msra.mxu0 0
    %2520 = vmatprep.subr.bf16.mxu0 0
    %2521 = vmatpush1.bf16.msra.mxu0 0
    %2522 = vmatprep.subr.bf16.mxu0 0
    %2523 = vmatpush1.bf16.msra.mxu0 0
    %2524 = vmatprep.subr.bf16.mxu0 0
    %2525 = vmatpush1.bf16.msra.mxu0 0
    %2526 = vmatprep.subr.bf16.mxu0 0
    %2527 = vmatpush1.bf16.msra.mxu0 0
    %2528 = vmatprep.mubr.bf16.mxu0 0
    %2529 = vmatmul.mubr.bf16.gmra.mrb[0].mxu0 %v1921
    %v2530 = vpop.f32.mrb[0].mxu0
    %v2531 = vadd.f32 %v2490, %v2530
    %v2532 = vpop.f32.mrb[0].mxu0
    %v2533 = vadd.f32 %v2492, %v2532
    %v2534 = vpop.f32.mrb[0].mxu0
    %v2535 = vpop.f32.mrb[0].mxu0
    %2536 = vdwg.mxu0
    %v2537 = vmax.f32 %v2531, 0.0
    %v2538 = vmax.f32 %v2533, 0.0
    %v2539 = vpack.c.bf16 %v2537, %v2537
    %v2540 = vpack.c.bf16 %v2538, %v2538
    %v2541 = vld [vmem:[%s7] sm:$0xf]
    %v2542 = vld [vmem:[%s7 + $0x4] sm:$0xf]
    %v2543 = vld [vmem:[%s7 + $0x8] sm:$0xf]
    %v2544 = vld [vmem:[%s7 + $0xc] sm:$0xf]
    %v2545 = vld [vmem:[%s7 + $0x10] sm:$0xf]
    %v2546 = vld [vmem:[%s7 + $0x14] sm:$0xf]
    %v2547 = vld [vmem:[%s7 + $0x18] sm:$0xf]
    %v2548 = vld [vmem:[%s7 + $0x1c] sm:$0xf]
    %v2549 = vld [vmem:[%s7 + $0x20] sm:$0xf]
    %v2550 = vld [vmem:[%s7 + $0x24] sm:$0xf]
    %v2551 = vld [vmem:[%s7 + $0x28] sm:$0xf]
    %v2552 = vld [vmem:[%s7 + $0x2c] sm:$0xf]
    %v2553 = vld [vmem:[%s7 + $0x30] sm:$0xf]
    %v2554 = vld [vmem:[%s7 + $0x34] sm:$0xf]
    %v2555 = vld [vmem:[%s7 + $0x38] sm:$0xf]
    %v2556 = vld [vmem:[%s7 + $0x3c] sm:$0xf]
    %v2557 = vld [vmem:[%s7 + $0x40] sm:$0xf]
    %v2558 = vld [vmem:[%s7 + $0x44] sm:$0xf]
    %v2559 = vld [vmem:[%s7 + $0x48] sm:$0xf]
    %v2560 = vld [vmem:[%s7 + $0x4c] sm:$0xf]
    %v2561 = vld [vmem:[%s7 + $0x50] sm:$0xf]
    %v2562 = vld [vmem:[%s7 + $0x54] sm:$0xf]
    %v2563 = vld [vmem:[%s7 + $0x58] sm:$0xf]
    %v2564 = vld [vmem:[%s7 + $0x5c] sm:$0xf]
    %v2565 = vld [vmem:[%s7 + $0x60] sm:$0xf]
    %v2566 = vld [vmem:[%s7 + $0x64] sm:$0xf]
    %v2567 = vld [vmem:[%s7 + $0x68] sm:$0xf]
    %v2568 = vld [vmem:[%s7 + $0x6c] sm:$0xf]
    %v2569 = vld [vmem:[%s7 + $0x70] sm:$0xf]
    %v2570 = vld [vmem:[%s7 + $0x74] sm:$0xf]
    %v2571 = vld [vmem:[%s7 + $0x78] sm:$0xf]
    %v2572 = vld [vmem:[%s7 + $0x7c] sm:$0xf]
    %v2573 = vld [vmem:[%s8] sm:$0x1]
    %v2575 = vlaneseq
    %v2576 = vshrl.u32 %v2575, 7
    %v2577 = vsub.s32 0, %v2576
    %v2578 = vrot.slane %v2573, %v2577
    %v2612 = vunpack.c.l.b16 %v2541
    %v2613 = vunpack.c.l.b16 %v2542
    %v2614 = vunpack.c.l.b16 %v2543
    %v2615 = vunpack.c.l.b16 %v2544
    %v2616 = vunpack.c.l.b16 %v2545
    %v2617 = vunpack.c.l.b16 %v2546
    %v2618 = vunpack.c.l.b16 %v2547
    %v2619 = vunpack.c.l.b16 %v2548
    %v2620 = vunpack.c.l.b16 %v2549
    %v2621 = vunpack.c.l.b16 %v2550
    %v2622 = vunpack.c.l.b16 %v2551
    %v2623 = vunpack.c.l.b16 %v2552
    %v2624 = vunpack.c.l.b16 %v2553
    %v2625 = vunpack.c.l.b16 %v2554
    %v2626 = vunpack.c.l.b16 %v2555
    %v2627 = vunpack.c.l.b16 %v2556
    %v2628 = vunpack.c.l.b16 %v2557
    %v2629 = vunpack.c.l.b16 %v2558
    %v2630 = vunpack.c.l.b16 %v2559
    %v2631 = vunpack.c.l.b16 %v2560
    %v2632 = vunpack.c.l.b16 %v2561
    %v2633 = vunpack.c.l.b16 %v2562
    %v2634 = vunpack.c.l.b16 %v2563
    %v2635 = vunpack.c.l.b16 %v2564
    %v2636 = vunpack.c.l.b16 %v2565
    %v2637 = vunpack.c.l.b16 %v2566
    %v2638 = vunpack.c.l.b16 %v2567
    %v2639 = vunpack.c.l.b16 %v2568
    %v2640 = vunpack.c.l.b16 %v2569
    %v2641 = vunpack.c.l.b16 %v2570
    %v2642 = vunpack.c.l.b16 %v2571
    %v2643 = vunpack.c.l.b16 %v2572
    %v2644 = vpack.c.b16 %v2613, %v2612
    %v2645 = vpack.c.b16 %v2615, %v2614
    %v2646 = vpack.c.b16 %v2617, %v2616
    %v2647 = vpack.c.b16 %v2619, %v2618
    %v2648 = vpack.c.b16 %v2621, %v2620
    %v2649 = vpack.c.b16 %v2623, %v2622
    %v2650 = vpack.c.b16 %v2625, %v2624
    %v2651 = vpack.c.b16 %v2627, %v2626
    %v2652 = vpack.c.b16 %v2629, %v2628
    %v2653 = vpack.c.b16 %v2631, %v2630
    %v2654 = vpack.c.b16 %v2633, %v2632
    %v2655 = vpack.c.b16 %v2635, %v2634
    %v2656 = vpack.c.b16 %v2637, %v2636
    %v2657 = vpack.c.b16 %v2639, %v2638
    %v2658 = vpack.c.b16 %v2641, %v2640
    %v2659 = vpack.c.b16 %v2643, %v2642
    %2676 = vmatprep.subr.bf16.mxu0 0
    %2677 = vmatpush1.bf16.msra.mxu0 %v2644
    %2678 = vmatprep.subr.bf16.mxu0 0
    %2679 = vmatpush1.bf16.msra.mxu0 %v2645
    %2680 = vmatprep.subr.bf16.mxu0 0
    %2681 = vmatpush1.bf16.msra.mxu0 %v2646
    %2682 = vmatprep.subr.bf16.mxu0 0
    %2683 = vmatpush1.bf16.msra.mxu0 %v2647
    %2684 = vmatprep.subr.bf16.mxu0 0
    %2685 = vmatpush1.bf16.msra.mxu0 %v2648
    %2686 = vmatprep.subr.bf16.mxu0 0
    %2687 = vmatpush1.bf16.msra.mxu0 %v2649
    %2688 = vmatprep.subr.bf16.mxu0 0
    %2689 = vmatpush1.bf16.msra.mxu0 %v2650
    %2690 = vmatprep.subr.bf16.mxu0 0
    %2691 = vmatpush1.bf16.msra.mxu0 %v2651
    %2692 = vmatprep.subr.bf16.mxu0 0
    %2693 = vmatpush1.bf16.msra.mxu0 %v2652
    %2694 = vmatprep.subr.bf16.mxu0 0
    %2695 = vmatpush1.bf16.msra.mxu0 %v2653
    %2696 = vmatprep.subr.bf16.mxu0 0
    %2697 = vmatpush1.bf16.msra.mxu0 %v2654
    %2698 = vmatprep.subr.bf16.mxu0 0
    %2699 = vmatpush1.bf16.msra.mxu0 %v2655
    %2700 = vmatprep.subr.bf16.mxu0 0
    %2701 = vmatpush1.bf16.msra.mxu0 %v2656
    %2702 = vmatprep.subr.bf16.mxu0 0
    %2703 = vmatpush1.bf16.msra.mxu0 %v2657
    %2704 = vmatprep.subr.bf16.mxu0 0
    %2705 = vmatpush1.bf16.msra.mxu0 %v2658
    %2706 = vmatprep.subr.bf16.mxu0 0
    %2707 = vmatpush1.bf16.msra.mxu0 %v2659
    %2708 = vmatprep.mubr.bf16.mxu0 %v2540
    %2709 = vmatmul.mubr.bf16.gmra.mrb[0].mxu0 %v2539
    %v2710 = vpop.f32.mrb[0].mxu0
    %v2711 = vadd.f32 %v2578, %v2710
    %v2712 = vpop.f32.mrb[0].mxu0
    %v2713 = vpop.f32.mrb[0].mxu0
    %v2714 = vpop.f32.mrb[0].mxu0
    %2715 = vdwg.mxu0
    %v2716 = vmax.f32 %v2711, 0.0
    %v2717 = vpack.c.bf16 %v2716, %v2716
    %v2718 = vld [vmem:[#allocation8] sm:$0xf]
    %v2719 = vld [vmem:[#allocation8 + $0x4] sm:$0xf]
    %v2720 = vld [vmem:[#allocation8 + $0x8] sm:$0xf]
    %v2721 = vld [vmem:[#allocation8 + $0xc] sm:$0xf]
    %v2722 = vld [vmem:[#allocation8 + $0x10] sm:$0xf]
    %v2723 = vld [vmem:[#allocation8 + $0x14] sm:$0xf]
    %v2724 = vld [vmem:[#allocation8 + $0x18] sm:$0xf]
    %v2725 = vld [vmem:[#allocation8 + $0x1c] sm:$0xf]
    %v2726 = vld [vmem:[#allocation8 + $0x20] sm:$0xf]
    %v2727 = vld [vmem:[#allocation8 + $0x24] sm:$0xf]
    %v2728 = vld [vmem:[#allocation8 + $0x28] sm:$0xf]
    %v2729 = vld [vmem:[#allocation8 + $0x2c] sm:$0xf]
    %v2730 = vld [vmem:[#allocation8 + $0x30] sm:$0xf]
    %v2731 = vld [vmem:[#allocation8 + $0x34] sm:$0xf]
    %v2732 = vld [vmem:[#allocation8 + $0x38] sm:$0xf]
    %v2733 = vld [vmem:[#allocation8 + $0x3c] sm:$0xf]
    %v2734 = vld [vmem:[%s10] sm:$0x1]
    %v2736 = vlaneseq
    %v2737 = vshrl.u32 %v2736, 7
    %v2738 = vsub.s32 0, %v2737
    %v2739 = vrot.slane %v2734, %v2738
    %v2757 = vunpack.c.l.b16 %v2718
    %v2758 = vunpack.c.l.b16 %v2719
    %v2759 = vunpack.c.l.b16 %v2720
    %v2760 = vunpack.c.l.b16 %v2721
    %v2761 = vunpack.c.l.b16 %v2722
    %v2762 = vunpack.c.l.b16 %v2723
    %v2763 = vunpack.c.l.b16 %v2724
    %v2764 = vunpack.c.l.b16 %v2725
    %v2765 = vunpack.c.l.b16 %v2726
    %v2766 = vunpack.c.l.b16 %v2727
    %v2767 = vunpack.c.l.b16 %v2728
    %v2768 = vunpack.c.l.b16 %v2729
    %v2769 = vunpack.c.l.b16 %v2730
    %v2770 = vunpack.c.l.b16 %v2731
    %v2771 = vunpack.c.l.b16 %v2732
    %v2772 = vunpack.c.l.b16 %v2733
    %v2773 = vpack.c.b16 %v2758, %v2757
    %v2774 = vpack.c.b16 %v2760, %v2759
    %v2775 = vpack.c.b16 %v2762, %v2761
    %v2776 = vpack.c.b16 %v2764, %v2763
    %v2777 = vpack.c.b16 %v2766, %v2765
    %v2778 = vpack.c.b16 %v2768, %v2767
    %v2779 = vpack.c.b16 %v2770, %v2769
    %v2780 = vpack.c.b16 %v2772, %v2771
    %2789 = vmatprep.subr.bf16.mxu0 0
    %2790 = vmatpush1.bf16.msra.mxu0 %v2773
    %2791 = vmatprep.subr.bf16.mxu0 0
    %2792 = vmatpush1.bf16.msra.mxu0 %v2774
    %2793 = vmatprep.subr.bf16.mxu0 0
    %2794 = vmatpush1.bf16.msra.mxu0 %v2775
    %2795 = vmatprep.subr.bf16.mxu0 0
    %2796 = vmatpush1.bf16.msra.mxu0 %v2776
    %2797 = vmatprep.subr.bf16.mxu0 0
    %2798 = vmatpush1.bf16.msra.mxu0 %v2777
    %2799 = vmatprep.subr.bf16.mxu0 0
    %2800 = vmatpush1.bf16.msra.mxu0 %v2778
    %2801 = vmatprep.subr.bf16.mxu0 0
    %2802 = vmatpush1.bf16.msra.mxu0 %v2779
    %2803 = vmatprep.subr.bf16.mxu0 0
    %2804 = vmatpush1.bf16.msra.mxu0 %v2780
    %2805 = vmatprep.subr.bf16.mxu0 0
    %2806 = vmatpush1.bf16.msra.mxu0 0
    %2807 = vmatprep.subr.bf16.mxu0 0
    %2808 = vmatpush1.bf16.msra.mxu0 0
    %2809 = vmatprep.subr.bf16.mxu0 0
    %2810 = vmatpush1.bf16.msra.mxu0 0
    %2811 = vmatprep.subr.bf16.mxu0 0
    %2812 = vmatpush1.bf16.msra.mxu0 0
    %2813 = vmatprep.subr.bf16.mxu0 0
    %2814 = vmatpush1.bf16.msra.mxu0 0
    %2815 = vmatprep.subr.bf16.mxu0 0
    %2816 = vmatpush1.bf16.msra.mxu0 0
    %2817 = vmatprep.subr.bf16.mxu0 0
    %2818 = vmatpush1.bf16.msra.mxu0 0
    %2819 = vmatprep.subr.bf16.mxu0 0
    %2820 = vmatpush1.bf16.msra.mxu0 0
    %2821 = vmatprep.mubr.bf16.mxu0 0
    %2822 = vmatmul.mubr.bf16.gmra.mrb[0].mxu0 %v2717
    %v2823 = vpop.f32.mrb[0].mxu0
    %v2824 = vadd.f32 %v2739, %v2823
    %v2825 = vpop.f32.mrb[0].mxu0
    %v2826 = vpop.f32.mrb[0].mxu0
    %v2827 = vpop.f32.mrb[0].mxu0
    %2828 = vdwg.mxu0
    %2829 = vst [vmem:[#allocation10] sm:$0x3] %v2824
    // Predicated region
    $region62: #{dqn_forward_fused.1} parent=1 // pred_check
      _
    $region63: #{dqn_forward_fused.1} parent=1 // pred_check_branch
      %2831 = sbr.rel (0) target = $region65
    $region64: #{dqn_forward_fused.1} parent=1 // pred_region
      %s2833 = ssub.s32 32, 32
      %2834 = vsyncadd [#allocation4], %s2833
      %s2836 = sshll.u32 [#allocation10], 4
      %s2837 = int_to_ptr.vmem [resolvable:$true] %s2836
      %2839 = dma.vmem_to_hbm [thread:$0]  %s2837, 32, %s11, [#allocation4]
    $region65: #{dqn_forward_fused.1} parent=1 // pred_fallthru
      _
    // Predicated region
    $region66: #{dqn_forward_fused.1} parent=1 // pred_check
      _
    $region67: #{dqn_forward_fused.1} parent=1 // pred_check_branch
      %2841 = sbr.rel (0) target = $region69
    $region68: #{dqn_forward_fused.1} parent=1 // pred_region
      %2842 = dma.done [#allocation4], 32
    $region69: #{dqn_forward_fused.1} parent=1 // pred_fallthru
      _
    %2843 = vsyncpa [#allocation3], 1
    %2844 = vsyncpa [#allocation6], 1
    %2845 = vsyncpa [#allocation9], 1
    %2846 = vsyncpa [#allocation4], 1

</llo_original>
